<compile_context>
chip_gen: v7x
topology: tpu7x:2x2x1
jax: 0.10.0
libtpu: 0.0.40
codegen_flags: <defaults>
</compile_context>

<pallas_src>
import jax
import jax.numpy as jnp
from jax.experimental import pallas as pl
from jax.experimental.pallas import tpu as pltpu


def _round_up(n, m):
    return ((n + m - 1) // m) * m


def _make_lstm_kernel(T_total, needs_mask):
    """Builds the chunked recurrent kernel (T_total / mask are static)."""

    def kernel(x_ref, wih_ref, whh_ref, b_ref, hlast_ref,
               gates_scr, h_scr, c_scr):
        # x_ref   : (TT, Bp, I)    raw inputs for this time chunk
        # wih_ref : (I, 4*Hp)      W_ih^T, per-gate columns lane-padded
        # whh_ref : (Hp, 4*Hp)     W_hh^T, per-gate columns lane-padded
        # b_ref   : (1, 4*Hp)      b_ih + b_hh, lane-padded
        # hlast_ref: (Bp, Hp)      h at the final timestep
        # gates_scr: (TT, Bp, 4*Hp) per-chunk x-projection scratch
        # h_scr/c_scr: (Bp, Hp)    state carried across time chunks
        chunk = pl.program_id(0)
        tt, bp, i_sz = x_ref.shape
        hp = h_scr.shape[-1]

        @pl.when(chunk == 0)
        def _():
            h_scr[...] = jnp.zeros_like(h_scr)
            c_scr[...] = jnp.zeros_like(c_scr)

        # ---- fused input projection for the whole chunk (one MXU matmul) ----
        xb = x_ref[...].reshape(tt * bp, i_sz).astype(wih_ref.dtype)
        gx = jnp.dot(xb, wih_ref[...], preferred_element_type=jnp.float32)
        gates_scr[...] = gx.reshape(tt, bp, 4 * hp) + b_ref[...]

        # ---- serial recurrence; h/c carried as loop values (vregs) ----------
        def step(t, carry):
            h, c = carry
            # NOTE: whh_ref is deliberately read inside the loop body; hoisting
            # it keeps a 256 KiB weight live across iterations and spills.
            gates = gates_scr[t] + jnp.dot(
                h.astype(whh_ref.dtype), whh_ref[...],
                preferred_element_type=jnp.float32)
            # Gate order [i, f, o, g]: sigmoid gates are one contiguous slice.
            sig = jax.nn.sigmoid(gates[:, :3 * hp])
            i_g = sig[:, 0 * hp:1 * hp]
            f_g = sig[:, 1 * hp:2 * hp]
            o_g = sig[:, 2 * hp:3 * hp]
            g_g = jnp.tanh(gates[:, 3 * hp:])
            c_new = f_g * c + i_g * g_g
            h_new = o_g * jnp.tanh(c_new)
            if needs_mask:  # only the ragged tail chunk pays for this select
                valid = (chunk * tt + t) < T_total
                h_new = jnp.where(valid, h_new, h)
                c_new = jnp.where(valid, c_new, c)
            return (h_new, c_new)

        unroll = tt if tt <= 16 else 8
        h, c = jax.lax.fori_loop(0, tt, step, (h_scr[...], c_scr[...]),
                                 unroll=unroll)
        h_scr[...] = h
        c_scr[...] = c
        # Write every chunk (free; robust against output-writeback changes).
        hlast_ref[...] = h

    return kernel


def lstm_forward(x, w_ih, w_hh, b_ih, b_hh, w_fc, b_fc, *,
                 max_time_chunk=128, matmul_dtype=jnp.float32):
    """x: (B, T, I) float32. Returns (B, O), matching the PyTorch module."""
    B, T, I = x.shape
    H = w_hh.shape[1]
    O = w_fc.shape[0]

    Bp = _round_up(B, 8)        # sublane alignment
    Hp = _round_up(H, 128)      # per-gate lane alignment

    # --- gate repack [i, f, g, o] -> [i, f, o, g], transpose, lane-pad -------
    perm = jnp.array([0, 1, 3, 2])
    wih_g = w_ih.reshape(4, H, I)[perm]          # (4, H, I)
    whh_g = w_hh.reshape(4, H, H)[perm]          # (4, H, H)
    b_g = (b_ih + b_hh).reshape(4, H)[perm]      # (4, H)

    wih_p = (jnp.zeros((I, 4, Hp), jnp.float32)
             .at[:, :, :H].set(jnp.transpose(wih_g, (2, 0, 1)))
             .reshape(I, 4 * Hp).astype(matmul_dtype))
    whh_p = (jnp.zeros((Hp, 4, Hp), jnp.float32)
             .at[:H, :, :H].set(jnp.transpose(whh_g, (2, 0, 1)))
             .reshape(Hp, 4 * Hp).astype(matmul_dtype))
    b_p = (jnp.zeros((4, Hp), jnp.float32)
           .at[:, :H].set(b_g).reshape(1, 4 * Hp))          # stays f32

    # --- time chunking: cdiv + masked tail (no degenerate TT=1) --------------
    TT = T if T <= max_time_chunk else max_time_chunk
    n_chunks = pl.cdiv(T, TT)
    T_pad = n_chunks * TT
    needs_mask = T_pad != T

    # x -> (T_pad, Bp, I), zero-padded (padded rows/steps are masked/sliced off)
    x_p = (jnp.zeros((T_pad, Bp, I), jnp.float32)
           .at[:T, :B].set(jnp.swapaxes(x, 0, 1)))

    # --- explicit VMEM budget (double-buffered I/O + scratch), v7x-safe cap --
    w_item = jnp.dtype(matmul_dtype).itemsize
    vmem_est = (2 * TT * Bp * I * 4                       # x chunk (dbl-buf)
                + 2 * (I * 4 * Hp + Hp * 4 * Hp) * w_item  # weights (dbl-buf)
                + 2 * 4 * Hp * 4                           # bias
                + 2 * Bp * Hp * 4                          # hlast output
                + TT * Bp * 4 * Hp * 4                     # gates scratch
                + 2 * Bp * Hp * 4)                         # h/c scratch
    vmem_limit = int(min(max(2 * vmem_est, 8 << 20), 64 << 20))

    kernel = _make_lstm_kernel(T, needs_mask)

    # NOTE: for large B on v7x, a leading "parallel" batch-block grid axis
    # would let the second TensorCore run an independent batch shard; omitted
    # here (B is tiny).
    h_last = pl.pallas_call(
        kernel,
        out_shape=jax.ShapeDtypeStruct((Bp, Hp), jnp.float32),
        grid_spec=pltpu.PrefetchScalarGridSpec(
            num_scalar_prefetch=0,
            grid=(n_chunks,),
            in_specs=[
                pl.BlockSpec((TT, Bp, I), lambda c: (c, 0, 0)),   # x chunk
                pl.BlockSpec((I, 4 * Hp), lambda c: (0, 0)),      # W_ih^T
                pl.BlockSpec((Hp, 4 * Hp), lambda c: (0, 0)),     # W_hh^T
                pl.BlockSpec((1, 4 * Hp), lambda c: (0, 0)),      # bias
            ],
            out_specs=pl.BlockSpec((Bp, Hp), lambda c: (0, 0)),
            scratch_shapes=[
                pltpu.VMEM((TT, Bp, 4 * Hp), jnp.float32),  # gates chunk
                pltpu.VMEM((Bp, Hp), jnp.float32),          # h state
                pltpu.VMEM((Bp, Hp), jnp.float32),          # c state
            ],
        ),
        compiler_params=pltpu.CompilerParams(
            dimension_semantics=("arbitrary",),
            vmem_limit_bytes=vmem_limit),
    )(x_p, wih_p, whh_p, b_p)

    # --- final FC outside the recurrent kernel (tiny, lane-sparse O) ---------
    return h_last[:B, :H] @ jnp.transpose(w_fc) + b_fc.reshape(1, O)


def lstm_forward_ref(x, w_ih, w_hh, b_ih, b_hh, w_fc, b_fc):
    """Pure-JAX reference (PyTorch nn.LSTM semantics, zero init states)."""
    B, T, I = x.shape
    H = w_hh.shape[1]

    def step(carry, x_t):
        h, c = carry
        gates = x_t @ w_ih.T + b_ih + h @ w_hh.T + b_hh
        i = jax.nn.sigmoid(gates[:, 0 * H:1 * H])
        f = jax.nn.sigmoid(gates[:, 1 * H:2 * H])
        g = jnp.tanh(gates[:, 2 * H:3 * H])
        o = jax.nn.sigmoid(gates[:, 3 * H:4 * H])
        c = f * c + i * g
        h = o * jnp.tanh(c)
        return (h, c), None

    h0 = jnp.zeros((B, H), jnp.float32)
    c0 = jnp.zeros((B, H), jnp.float32)
    (h_last, _), _ = jax.lax.scan(step, (h0, c0), jnp.swapaxes(x, 0, 1))
    return h_last @ w_fc.T + b_fc


if __name__ == "__main__":
    # Small shapes consistent with the module's forward: (B, T, input_size)
    B, T, I, H, O = 2, 8, 8, 32, 1

    key = jax.random.PRNGKey(0)
    k = jax.random.split(key, 7)
    bound = 1.0 / jnp.sqrt(H)   # PyTorch default uniform(-1/sqrt(H), 1/sqrt(H))

    x    = jax.random.normal(k[0], (B, T, I), dtype=jnp.float32)
    w_ih = jax.random.uniform(k[1], (4 * H, I), jnp.float32, -bound, bound)
    w_hh = jax.random.uniform(k[2], (4 * H, H), jnp.float32, -bound, bound)
    b_ih = jax.random.uniform(k[3], (4 * H,), jnp.float32, -bound, bound)
    b_hh = jax.random.uniform(k[4], (4 * H,), jnp.float32, -bound, bound)
    w_fc = jax.random.uniform(k[5], (O, H), jnp.float32, -bound, bound)
    b_fc = jax.random.uniform(k[6], (O,), jnp.float32, -bound, bound)

    out = lstm_forward(x, w_ih, w_hh, b_ih, b_hh, w_fc, b_fc)
    out = jax.block_until_ready(out)

    ref = lstm_forward_ref(x, w_ih, w_hh, b_ih, b_hh, w_fc, b_fc)
    assert out.shape == (B, O), (out.shape, (B, O))
    assert jnp.allclose(out, ref, atol=1e-5, rtol=1e-5), (out, ref)

    print("KERNEL_OK")
</pallas_src>

<mosaic_0001>
module attributes {stable_mosaic.version = 11 : i64} {
  func.func @kernel(%arg0: i32, %arg1: memref<8x8x8xf32, #tpu.memory_space<vmem>>, %arg2: memref<8x512xf32, #tpu.memory_space<vmem>>, %arg3: memref<128x512xf32, #tpu.memory_space<vmem>>, %arg4: memref<1x512xf32, #tpu.memory_space<vmem>>, %arg5: memref<8x128xf32, #tpu.memory_space<vmem>>, %arg6: memref<8x8x512xf32, #tpu.memory_space<vmem>>, %arg7: memref<8x128xf32, #tpu.memory_space<vmem>>, %arg8: memref<8x128xf32, #tpu.memory_space<vmem>>) attributes {dimension_semantics = [#tpu.dimension_semantics<arbitrary>], iteration_bounds = array<i64: 1>, scalar_prefetch = 0 : i64, scratch_operands = 3 : i64, tpu.core_type = #tpu.core_type<tc>, window_params = [{transform_indices = @transform_0, window_bounds = array<i64: 8, 8, 8>}, {pipeline_mode = #tpu.pipeline_mode<synchronous>, transform_indices = @transform_1, window_bounds = array<i64: 8, 512>}, {pipeline_mode = #tpu.pipeline_mode<synchronous>, transform_indices = @transform_2, window_bounds = array<i64: 128, 512>}, {pipeline_mode = #tpu.pipeline_mode<synchronous>, transform_indices = @transform_3, window_bounds = array<i64: 1, 512>}, {pipeline_mode = #tpu.pipeline_mode<synchronous>, transform_indices = @transform_4, window_bounds = array<i64: 8, 128>}]} {
    %c0_i32 = arith.constant 0 : i32
    %0 = arith.cmpi eq, %arg0, %c0_i32 : i32
    %1 = arith.extui %0 : i1 to i32
    %c0_i32_0 = arith.constant 0 : i32
    %2 = arith.cmpi ne, %1, %c0_i32_0 : i32
    scf.if %2 {
      %cst_69 = arith.constant 0.000000e+00 : f32
      %194 = vector.broadcast %cst_69 : f32 to vector<8x128xf32>
      %c0_70 = arith.constant 0 : index
      %c0_71 = arith.constant 0 : index
      %195 = vector.load %arg7[%c0_70, %c0_71] : memref<8x128xf32, #tpu.memory_space<vmem>>, vector<8x128xf32>
      tpu.vector_store %arg7[%c0_70, %c0_71], %194 {strides = array<i32>} : memref<8x128xf32, #tpu.memory_space<vmem>>, vector<8x128xf32>,
      %cst_72 = arith.constant 0.000000e+00 : f32
      %196 = vector.broadcast %cst_72 : f32 to vector<8x128xf32>
      %c0_73 = arith.constant 0 : index
      %c0_74 = arith.constant 0 : index
      %197 = vector.load %arg8[%c0_73, %c0_74] : memref<8x128xf32, #tpu.memory_space<vmem>>, vector<8x128xf32>
      tpu.vector_store %arg8[%c0_73, %c0_74], %196 {strides = array<i32>} : memref<8x128xf32, #tpu.memory_space<vmem>>, vector<8x128xf32>,
    } else {
    }
    %c0 = arith.constant 0 : index
    %c0_1 = arith.constant 0 : index
    %c0_2 = arith.constant 0 : index
    %3 = vector.load %arg1[%c0, %c0_1, %c0_2] : memref<8x8x8xf32, #tpu.memory_space<vmem>>, vector<8x8x8xf32>
    %4 = vector.shape_cast %3 : vector<8x8x8xf32> to vector<64x8xf32>
    %c0_3 = arith.constant 0 : index
    %c0_4 = arith.constant 0 : index
    %5 = vector.load %arg2[%c0_3, %c0_4] : memref<8x512xf32, #tpu.memory_space<vmem>>, vector<8x512xf32>
    %cst = arith.constant dense<0.000000e+00> : vector<64x512xf32>
    %6 = tpu.matmul %4, %5, %cst {dimension_numbers = #tpu.dot_dimension_numbers<[1], [0], [0], [1], [0, 0, 1, 1], [], []>} : vector<64x8xf32>, vector<8x512xf32>, vector<64x512xf32> -> vector<64x512xf32>
    %7 = vector.shape_cast %6 : vector<64x512xf32> to vector<8x8x512xf32>
    %c0_5 = arith.constant 0 : index
    %c0_6 = arith.constant 0 : index
    %8 = vector.load %arg4[%c0_5, %c0_6] : memref<1x512xf32, #tpu.memory_space<vmem>>, vector<1x512xf32>
    %9 = vector.shape_cast %8 : vector<1x512xf32> to vector<1x1x512xf32>
    %10 = vector.broadcast %9 : vector<1x1x512xf32> to vector<8x8x512xf32>
    %11 = arith.addf %7, %10 : vector<8x8x512xf32>
    %c0_7 = arith.constant 0 : index
    %c0_8 = arith.constant 0 : index
    %c0_9 = arith.constant 0 : index
    %12 = vector.load %arg6[%c0_7, %c0_8, %c0_9] : memref<8x8x512xf32, #tpu.memory_space<vmem>>, vector<8x8x512xf32>
    tpu.vector_store %arg6[%c0_7, %c0_8, %c0_9], %11 {strides = array<i32>} : memref<8x8x512xf32, #tpu.memory_space<vmem>>, vector<8x8x512xf32>,
    %c0_10 = arith.constant 0 : index
    %c0_11 = arith.constant 0 : index
    %13 = vector.load %arg7[%c0_10, %c0_11] : memref<8x128xf32, #tpu.memory_space<vmem>>, vector<8x128xf32>
    %c0_12 = arith.constant 0 : index
    %c0_13 = arith.constant 0 : index
    %14 = vector.load %arg8[%c0_12, %c0_13] : memref<8x128xf32, #tpu.memory_space<vmem>>, vector<8x128xf32>
    %c0_i32_14 = arith.constant 0 : i32
    %15 = arith.index_cast %c0_i32_14 : i32 to index
    %c0_15 = arith.constant 0 : index
    %c0_16 = arith.constant 0 : index
    %16 = vector.load %arg6[%15, %c0_15, %c0_16] : memref<8x8x512xf32, #tpu.memory_space<vmem>>, vector<1x8x512xf32>
    %17 = vector.shape_cast %16 : vector<1x8x512xf32> to vector<8x512xf32>
    %c0_17 = arith.constant 0 : index
    %c0_18 = arith.constant 0 : index
    %18 = vector.load %arg3[%c0_17, %c0_18] : memref<128x512xf32, #tpu.memory_space<vmem>>, vector<128x512xf32>
    %cst_19 = arith.constant dense<0.000000e+00> : vector<8x512xf32>
    %19 = tpu.matmul %13, %18, %cst_19 {dimension_numbers = #tpu.dot_dimension_numbers<[1], [0], [0], [1], [0, 0, 1, 1], [], []>} : vector<8x128xf32>, vector<128x512xf32>, vector<8x512xf32> -> vector<8x512xf32>
    %20 = arith.addf %17, %19 : vector<8x512xf32>
    %21 = vector.extract_strided_slice %20 {offsets = [0, 0], sizes = [8, 384], strides = [1, 1]} : vector<8x512xf32> to vector<8x384xf32>
    %22 = arith.negf %21 : vector<8x384xf32>
    %23 = math.exp %22 : vector<8x384xf32>
    %cst_20 = arith.constant 1.000000e+00 : f32
    %24 = vector.broadcast %cst_20 : f32 to vector<8x384xf32>
    %25 = arith.addf %24, %23 : vector<8x384xf32>
    %26 = arith.divf %24, %25 : vector<8x384xf32>
    %27 = vector.extract_strided_slice %26 {offsets = [0, 0], sizes = [8, 128], strides = [1, 1]} : vector<8x384xf32> to vector<8x128xf32>
    %28 = vector.extract_strided_slice %26 {offsets = [0, 128], sizes = [8, 128], strides = [1, 1]} : vector<8x384xf32> to vector<8x128xf32>
    %29 = vector.extract_strided_slice %26 {offsets = [0, 256], sizes = [8, 128], strides = [1, 1]} : vector<8x384xf32> to vector<8x128xf32>
    %30 = vector.extract_strided_slice %20 {offsets = [0, 384], sizes = [8, 128], strides = [1, 1]} : vector<8x512xf32> to vector<8x128xf32>
    %31 = math.tanh %30 : vector<8x128xf32>
    %32 = arith.mulf %28, %14 : vector<8x128xf32>
    %33 = arith.mulf %27, %31 : vector<8x128xf32>
    %34 = arith.addf %32, %33 : vector<8x128xf32>
    %35 = math.tanh %34 : vector<8x128xf32>
    %36 = arith.mulf %29, %35 : vector<8x128xf32>
    %c1_i32 = arith.constant 1 : i32
    %37 = arith.index_cast %c1_i32 : i32 to index
    %c0_21 = arith.constant 0 : index
    %c0_22 = arith.constant 0 : index
    %38 = vector.load %arg6[%37, %c0_21, %c0_22] : memref<8x8x512xf32, #tpu.memory_space<vmem>>, vector<1x8x512xf32>
    %39 = vector.shape_cast %38 : vector<1x8x512xf32> to vector<8x512xf32>
    %c0_23 = arith.constant 0 : index
    %c0_24 = arith.constant 0 : index
    %40 = vector.load %arg3[%c0_23, %c0_24] : memref<128x512xf32, #tpu.memory_space<vmem>>, vector<128x512xf32>
    %cst_25 = arith.constant dense<0.000000e+00> : vector<8x512xf32>
    %41 = tpu.matmul %36, %40, %cst_25 {dimension_numbers = #tpu.dot_dimension_numbers<[1], [0], [0], [1], [0, 0, 1, 1], [], []>} : vector<8x128xf32>, vector<128x512xf32>, vector<8x512xf32> -> vector<8x512xf32>
    %42 = arith.addf %39, %41 : vector<8x512xf32>
    %43 = vector.extract_strided_slice %42 {offsets = [0, 0], sizes = [8, 384], strides = [1, 1]} : vector<8x512xf32> to vector<8x384xf32>
    %44 = arith.negf %43 : vector<8x384xf32>
    %45 = math.exp %44 : vector<8x384xf32>
    %cst_26 = arith.constant 1.000000e+00 : f32
    %46 = vector.broadcast %cst_26 : f32 to vector<8x384xf32>
    %47 = arith.addf %46, %45 : vector<8x384xf32>
    %48 = arith.divf %46, %47 : vector<8x384xf32>
    %49 = vector.extract_strided_slice %48 {offsets = [0, 0], sizes = [8, 128], strides = [1, 1]} : vector<8x384xf32> to vector<8x128xf32>
    %50 = vector.extract_strided_slice %48 {offsets = [0, 128], sizes = [8, 128], strides = [1, 1]} : vector<8x384xf32> to vector<8x128xf32>
    %51 = vector.extract_strided_slice %48 {offsets = [0, 256], sizes = [8, 128], strides = [1, 1]} : vector<8x384xf32> to vector<8x128xf32>
    %52 = vector.extract_strided_slice %42 {offsets = [0, 384], sizes = [8, 128], strides = [1, 1]} : vector<8x512xf32> to vector<8x128xf32>
    %53 = math.tanh %52 : vector<8x128xf32>
    %54 = arith.mulf %50, %34 : vector<8x128xf32>
    %55 = arith.mulf %49, %53 : vector<8x128xf32>
    %56 = arith.addf %54, %55 : vector<8x128xf32>
    %57 = math.tanh %56 : vector<8x128xf32>
    %58 = arith.mulf %51, %57 : vector<8x128xf32>
    %c2_i32 = arith.constant 2 : i32
    %59 = arith.index_cast %c2_i32 : i32 to index
    %c0_27 = arith.constant 0 : index
    %c0_28 = arith.constant 0 : index
    %60 = vector.load %arg6[%59, %c0_27, %c0_28] : memref<8x8x512xf32, #tpu.memory_space<vmem>>, vector<1x8x512xf32>
    %61 = vector.shape_cast %60 : vector<1x8x512xf32> to vector<8x512xf32>
    %c0_29 = arith.constant 0 : index
    %c0_30 = arith.constant 0 : index
    %62 = vector.load %arg3[%c0_29, %c0_30] : memref<128x512xf32, #tpu.memory_space<vmem>>, vector<128x512xf32>
    %cst_31 = arith.constant dense<0.000000e+00> : vector<8x512xf32>
    %63 = tpu.matmul %58, %62, %cst_31 {dimension_numbers = #tpu.dot_dimension_numbers<[1], [0], [0], [1], [0, 0, 1, 1], [], []>} : vector<8x128xf32>, vector<128x512xf32>, vector<8x512xf32> -> vector<8x512xf32>
    %64 = arith.addf %61, %63 : vector<8x512xf32>
    %65 = vector.extract_strided_slice %64 {offsets = [0, 0], sizes = [8, 384], strides = [1, 1]} : vector<8x512xf32> to vector<8x384xf32>
    %66 = arith.negf %65 : vector<8x384xf32>
    %67 = math.exp %66 : vector<8x384xf32>
    %cst_32 = arith.constant 1.000000e+00 : f32
    %68 = vector.broadcast %cst_32 : f32 to vector<8x384xf32>
    %69 = arith.addf %68, %67 : vector<8x384xf32>
    %70 = arith.divf %68, %69 : vector<8x384xf32>
    %71 = vector.extract_strided_slice %70 {offsets = [0, 0], sizes = [8, 128], strides = [1, 1]} : vector<8x384xf32> to vector<8x128xf32>
    %72 = vector.extract_strided_slice %70 {offsets = [0, 128], sizes = [8, 128], strides = [1, 1]} : vector<8x384xf32> to vector<8x128xf32>
    %73 = vector.extract_strided_slice %70 {offsets = [0, 256], sizes = [8, 128], strides = [1, 1]} : vector<8x384xf32> to vector<8x128xf32>
    %74 = vector.extract_strided_slice %64 {offsets = [0, 384], sizes = [8, 128], strides = [1, 1]} : vector<8x512xf32> to vector<8x128xf32>
    %75 = math.tanh %74 : vector<8x128xf32>
    %76 = arith.mulf %72, %56 : vector<8x128xf32>
    %77 = arith.mulf %71, %75 : vector<8x128xf32>
    %78 = arith.addf %76, %77 : vector<8x128xf32>
    %79 = math.tanh %78 : vector<8x128xf32>
    %80 = arith.mulf %73, %79 : vector<8x128xf32>
    %c3_i32 = arith.constant 3 : i32
    %81 = arith.index_cast %c3_i32 : i32 to index
    %c0_33 = arith.constant 0 : index
    %c0_34 = arith.constant 0 : index
    %82 = vector.load %arg6[%81, %c0_33, %c0_34] : memref<8x8x512xf32, #tpu.memory_space<vmem>>, vector<1x8x512xf32>
    %83 = vector.shape_cast %82 : vector<1x8x512xf32> to vector<8x512xf32>
    %c0_35 = arith.constant 0 : index
    %c0_36 = arith.constant 0 : index
    %84 = vector.load %arg3[%c0_35, %c0_36] : memref<128x512xf32, #tpu.memory_space<vmem>>, vector<128x512xf32>
    %cst_37 = arith.constant dense<0.000000e+00> : vector<8x512xf32>
    %85 = tpu.matmul %80, %84, %cst_37 {dimension_numbers = #tpu.dot_dimension_numbers<[1], [0], [0], [1], [0, 0, 1, 1], [], []>} : vector<8x128xf32>, vector<128x512xf32>, vector<8x512xf32> -> vector<8x512xf32>
    %86 = arith.addf %83, %85 : vector<8x512xf32>
    %87 = vector.extract_strided_slice %86 {offsets = [0, 0], sizes = [8, 384], strides = [1, 1]} : vector<8x512xf32> to vector<8x384xf32>
    %88 = arith.negf %87 : vector<8x384xf32>
    %89 = math.exp %88 : vector<8x384xf32>
    %cst_38 = arith.constant 1.000000e+00 : f32
    %90 = vector.broadcast %cst_38 : f32 to vector<8x384xf32>
    %91 = arith.addf %90, %89 : vector<8x384xf32>
    %92 = arith.divf %90, %91 : vector<8x384xf32>
    %93 = vector.extract_strided_slice %92 {offsets = [0, 0], sizes = [8, 128], strides = [1, 1]} : vector<8x384xf32> to vector<8x128xf32>
    %94 = vector.extract_strided_slice %92 {offsets = [0, 128], sizes = [8, 128], strides = [1, 1]} : vector<8x384xf32> to vector<8x128xf32>
    %95 = vector.extract_strided_slice %92 {offsets = [0, 256], sizes = [8, 128], strides = [1, 1]} : vector<8x384xf32> to vector<8x128xf32>
    %96 = vector.extract_strided_slice %86 {offsets = [0, 384], sizes = [8, 128], strides = [1, 1]} : vector<8x512xf32> to vector<8x128xf32>
    %97 = math.tanh %96 : vector<8x128xf32>
    %98 = arith.mulf %94, %78 : vector<8x128xf32>
    %99 = arith.mulf %93, %97 : vector<8x128xf32>
    %100 = arith.addf %98, %99 : vector<8x128xf32>
    %101 = math.tanh %100 : vector<8x128xf32>
    %102 = arith.mulf %95, %101 : vector<8x128xf32>
    %c4_i32 = arith.constant 4 : i32
    %103 = arith.index_cast %c4_i32 : i32 to index
    %c0_39 = arith.constant 0 : index
    %c0_40 = arith.constant 0 : index
    %104 = vector.load %arg6[%103, %c0_39, %c0_40] : memref<8x8x512xf32, #tpu.memory_space<vmem>>, vector<1x8x512xf32>
    %105 = vector.shape_cast %104 : vector<1x8x512xf32> to vector<8x512xf32>
    %c0_41 = arith.constant 0 : index
    %c0_42 = arith.constant 0 : index
    %106 = vector.load %arg3[%c0_41, %c0_42] : memref<128x512xf32, #tpu.memory_space<vmem>>, vector<128x512xf32>
    %cst_43 = arith.constant dense<0.000000e+00> : vector<8x512xf32>
    %107 = tpu.matmul %102, %106, %cst_43 {dimension_numbers = #tpu.dot_dimension_numbers<[1], [0], [0], [1], [0, 0, 1, 1], [], []>} : vector<8x128xf32>, vector<128x512xf32>, vector<8x512xf32> -> vector<8x512xf32>
    %108 = arith.addf %105, %107 : vector<8x512xf32>
    %109 = vector.extract_strided_slice %108 {offsets = [0, 0], sizes = [8, 384], strides = [1, 1]} : vector<8x512xf32> to vector<8x384xf32>
    %110 = arith.negf %109 : vector<8x384xf32>
    %111 = math.exp %110 : vector<8x384xf32>
    %cst_44 = arith.constant 1.000000e+00 : f32
    %112 = vector.broadcast %cst_44 : f32 to vector<8x384xf32>
    %113 = arith.addf %112, %111 : vector<8x384xf32>
    %114 = arith.divf %112, %113 : vector<8x384xf32>
    %115 = vector.extract_strided_slice %114 {offsets = [0, 0], sizes = [8, 128], strides = [1, 1]} : vector<8x384xf32> to vector<8x128xf32>
    %116 = vector.extract_strided_slice %114 {offsets = [0, 128], sizes = [8, 128], strides = [1, 1]} : vector<8x384xf32> to vector<8x128xf32>
    %117 = vector.extract_strided_slice %114 {offsets = [0, 256], sizes = [8, 128], strides = [1, 1]} : vector<8x384xf32> to vector<8x128xf32>
    %118 = vector.extract_strided_slice %108 {offsets = [0, 384], sizes = [8, 128], strides = [1, 1]} : vector<8x512xf32> to vector<8x128xf32>
    %119 = math.tanh %118 : vector<8x128xf32>
    %120 = arith.mulf %116, %100 : vector<8x128xf32>
    %121 = arith.mulf %115, %119 : vector<8x128xf32>
    %122 = arith.addf %120, %121 : vector<8x128xf32>
    %123 = math.tanh %122 : vector<8x128xf32>
    %124 = arith.mulf %117, %123 : vector<8x128xf32>
    %c5_i32 = arith.constant 5 : i32
    %125 = arith.index_cast %c5_i32 : i32 to index
    %c0_45 = arith.constant 0 : index
    %c0_46 = arith.constant 0 : index
    %126 = vector.load %arg6[%125, %c0_45, %c0_46] : memref<8x8x512xf32, #tpu.memory_space<vmem>>, vector<1x8x512xf32>
    %127 = vector.shape_cast %126 : vector<1x8x512xf32> to vector<8x512xf32>
    %c0_47 = arith.constant 0 : index
    %c0_48 = arith.constant 0 : index
    %128 = vector.load %arg3[%c0_47, %c0_48] : memref<128x512xf32, #tpu.memory_space<vmem>>, vector<128x512xf32>
    %cst_49 = arith.constant dense<0.000000e+00> : vector<8x512xf32>
    %129 = tpu.matmul %124, %128, %cst_49 {dimension_numbers = #tpu.dot_dimension_numbers<[1], [0], [0], [1], [0, 0, 1, 1], [], []>} : vector<8x128xf32>, vector<128x512xf32>, vector<8x512xf32> -> vector<8x512xf32>
    %130 = arith.addf %127, %129 : vector<8x512xf32>
    %131 = vector.extract_strided_slice %130 {offsets = [0, 0], sizes = [8, 384], strides = [1, 1]} : vector<8x512xf32> to vector<8x384xf32>
    %132 = arith.negf %131 : vector<8x384xf32>
    %133 = math.exp %132 : vector<8x384xf32>
    %cst_50 = arith.constant 1.000000e+00 : f32
    %134 = vector.broadcast %cst_50 : f32 to vector<8x384xf32>
    %135 = arith.addf %134, %133 : vector<8x384xf32>
    %136 = arith.divf %134, %135 : vector<8x384xf32>
    %137 = vector.extract_strided_slice %136 {offsets = [0, 0], sizes = [8, 128], strides = [1, 1]} : vector<8x384xf32> to vector<8x128xf32>
    %138 = vector.extract_strided_slice %136 {offsets = [0, 128], sizes = [8, 128], strides = [1, 1]} : vector<8x384xf32> to vector<8x128xf32>
    %139 = vector.extract_strided_slice %136 {offsets = [0, 256], sizes = [8, 128], strides = [1, 1]} : vector<8x384xf32> to vector<8x128xf32>
    %140 = vector.extract_strided_slice %130 {offsets = [0, 384], sizes = [8, 128], strides = [1, 1]} : vector<8x512xf32> to vector<8x128xf32>
    %141 = math.tanh %140 : vector<8x128xf32>
    %142 = arith.mulf %138, %122 : vector<8x128xf32>
    %143 = arith.mulf %137, %141 : vector<8x128xf32>
    %144 = arith.addf %142, %143 : vector<8x128xf32>
    %145 = math.tanh %144 : vector<8x128xf32>
    %146 = arith.mulf %139, %145 : vector<8x128xf32>
    %c6_i32 = arith.constant 6 : i32
    %147 = arith.index_cast %c6_i32 : i32 to index
    %c0_51 = arith.constant 0 : index
    %c0_52 = arith.constant 0 : index
    %148 = vector.load %arg6[%147, %c0_51, %c0_52] : memref<8x8x512xf32, #tpu.memory_space<vmem>>, vector<1x8x512xf32>
    %149 = vector.shape_cast %148 : vector<1x8x512xf32> to vector<8x512xf32>
    %c0_53 = arith.constant 0 : index
    %c0_54 = arith.constant 0 : index
    %150 = vector.load %arg3[%c0_53, %c0_54] : memref<128x512xf32, #tpu.memory_space<vmem>>, vector<128x512xf32>
    %cst_55 = arith.constant dense<0.000000e+00> : vector<8x512xf32>
    %151 = tpu.matmul %146, %150, %cst_55 {dimension_numbers = #tpu.dot_dimension_numbers<[1], [0], [0], [1], [0, 0, 1, 1], [], []>} : vector<8x128xf32>, vector<128x512xf32>, vector<8x512xf32> -> vector<8x512xf32>
    %152 = arith.addf %149, %151 : vector<8x512xf32>
    %153 = vector.extract_strided_slice %152 {offsets = [0, 0], sizes = [8, 384], strides = [1, 1]} : vector<8x512xf32> to vector<8x384xf32>
    %154 = arith.negf %153 : vector<8x384xf32>
    %155 = math.exp %154 : vector<8x384xf32>
    %cst_56 = arith.constant 1.000000e+00 : f32
    %156 = vector.broadcast %cst_56 : f32 to vector<8x384xf32>
    %157 = arith.addf %156, %155 : vector<8x384xf32>
    %158 = arith.divf %156, %157 : vector<8x384xf32>
    %159 = vector.extract_strided_slice %158 {offsets = [0, 0], sizes = [8, 128], strides = [1, 1]} : vector<8x384xf32> to vector<8x128xf32>
    %160 = vector.extract_strided_slice %158 {offsets = [0, 128], sizes = [8, 128], strides = [1, 1]} : vector<8x384xf32> to vector<8x128xf32>
    %161 = vector.extract_strided_slice %158 {offsets = [0, 256], sizes = [8, 128], strides = [1, 1]} : vector<8x384xf32> to vector<8x128xf32>
    %162 = vector.extract_strided_slice %152 {offsets = [0, 384], sizes = [8, 128], strides = [1, 1]} : vector<8x512xf32> to vector<8x128xf32>
    %163 = math.tanh %162 : vector<8x128xf32>
    %164 = arith.mulf %160, %144 : vector<8x128xf32>
    %165 = arith.mulf %159, %163 : vector<8x128xf32>
    %166 = arith.addf %164, %165 : vector<8x128xf32>
    %167 = math.tanh %166 : vector<8x128xf32>
    %168 = arith.mulf %161, %167 : vector<8x128xf32>
    %c7_i32 = arith.constant 7 : i32
    %169 = arith.index_cast %c7_i32 : i32 to index
    %c0_57 = arith.constant 0 : index
    %c0_58 = arith.constant 0 : index
    %170 = vector.load %arg6[%169, %c0_57, %c0_58] : memref<8x8x512xf32, #tpu.memory_space<vmem>>, vector<1x8x512xf32>
    %171 = vector.shape_cast %170 : vector<1x8x512xf32> to vector<8x512xf32>
    %c0_59 = arith.constant 0 : index
    %c0_60 = arith.constant 0 : index
    %172 = vector.load %arg3[%c0_59, %c0_60] : memref<128x512xf32, #tpu.memory_space<vmem>>, vector<128x512xf32>
    %cst_61 = arith.constant dense<0.000000e+00> : vector<8x512xf32>
    %173 = tpu.matmul %168, %172, %cst_61 {dimension_numbers = #tpu.dot_dimension_numbers<[1], [0], [0], [1], [0, 0, 1, 1], [], []>} : vector<8x128xf32>, vector<128x512xf32>, vector<8x512xf32> -> vector<8x512xf32>
    %174 = arith.addf %171, %173 : vector<8x512xf32>
    %175 = vector.extract_strided_slice %174 {offsets = [0, 0], sizes = [8, 384], strides = [1, 1]} : vector<8x512xf32> to vector<8x384xf32>
    %176 = arith.negf %175 : vector<8x384xf32>
    %177 = math.exp %176 : vector<8x384xf32>
    %cst_62 = arith.constant 1.000000e+00 : f32
    %178 = vector.broadcast %cst_62 : f32 to vector<8x384xf32>
    %179 = arith.addf %178, %177 : vector<8x384xf32>
    %180 = arith.divf %178, %179 : vector<8x384xf32>
    %181 = vector.extract_strided_slice %180 {offsets = [0, 0], sizes = [8, 128], strides = [1, 1]} : vector<8x384xf32> to vector<8x128xf32>
    %182 = vector.extract_strided_slice %180 {offsets = [0, 128], sizes = [8, 128], strides = [1, 1]} : vector<8x384xf32> to vector<8x128xf32>
    %183 = vector.extract_strided_slice %180 {offsets = [0, 256], sizes = [8, 128], strides = [1, 1]} : vector<8x384xf32> to vector<8x128xf32>
    %184 = vector.extract_strided_slice %174 {offsets = [0, 384], sizes = [8, 128], strides = [1, 1]} : vector<8x512xf32> to vector<8x128xf32>
    %185 = math.tanh %184 : vector<8x128xf32>
    %186 = arith.mulf %182, %166 : vector<8x128xf32>
    %187 = arith.mulf %181, %185 : vector<8x128xf32>
    %188 = arith.addf %186, %187 : vector<8x128xf32>
    %189 = math.tanh %188 : vector<8x128xf32>
    %190 = arith.mulf %183, %189 : vector<8x128xf32>
    %c8_i32 = arith.constant 8 : i32
    %c0_63 = arith.constant 0 : index
    %c0_64 = arith.constant 0 : index
    %191 = vector.load %arg7[%c0_63, %c0_64] : memref<8x128xf32, #tpu.memory_space<vmem>>, vector<8x128xf32>
    tpu.vector_store %arg7[%c0_63, %c0_64], %190 {strides = array<i32>} : memref<8x128xf32, #tpu.memory_space<vmem>>, vector<8x128xf32>,
    %c0_65 = arith.constant 0 : index
    %c0_66 = arith.constant 0 : index
    %192 = vector.load %arg8[%c0_65, %c0_66] : memref<8x128xf32, #tpu.memory_space<vmem>>, vector<8x128xf32>
    tpu.vector_store %arg8[%c0_65, %c0_66], %188 {strides = array<i32>} : memref<8x128xf32, #tpu.memory_space<vmem>>, vector<8x128xf32>,
    %c0_67 = arith.constant 0 : index
    %c0_68 = arith.constant 0 : index
    %193 = vector.load %arg5[%c0_67, %c0_68] : memref<8x128xf32, #tpu.memory_space<vmem>>, vector<8x128xf32>
    tpu.vector_store %arg5[%c0_67, %c0_68], %190 {strides = array<i32>} : memref<8x128xf32, #tpu.memory_space<vmem>>, vector<8x128xf32>,
    return
  }
  func.func @transform_0(%arg0: i32) -> (i32, i32, i32) {
    %c0_i32 = arith.constant 0 : i32
    %c0_i32_0 = arith.constant 0 : i32
    %c0_i32_1 = arith.constant 0 : i32
    return %arg0, %c0_i32, %c0_i32_0 : i32, i32, i32
  }
  func.func @transform_1(%arg0: i32) -> (i32, i32) {
    %c0_i32 = arith.constant 0 : i32
    %c0_i32_0 = arith.constant 0 : i32
    %c0_i32_1 = arith.constant 0 : i32
    return %c0_i32, %c0_i32_0 : i32, i32
  }
  func.func @transform_2(%arg0: i32) -> (i32, i32) {
    %c0_i32 = arith.constant 0 : i32
    %c0_i32_0 = arith.constant 0 : i32
    %c0_i32_1 = arith.constant 0 : i32
    return %c0_i32, %c0_i32_0 : i32, i32
  }
  func.func @transform_3(%arg0: i32) -> (i32, i32) {
    %c0_i32 = arith.constant 0 : i32
    %c0_i32_0 = arith.constant 0 : i32
    %c0_i32_1 = arith.constant 0 : i32
    return %c0_i32, %c0_i32_0 : i32, i32
  }
  func.func @transform_4(%arg0: i32) -> (i32, i32) {
    %c0_i32 = arith.constant 0 : i32
    %c0_i32_0 = arith.constant 0 : i32
    %c0_i32_1 = arith.constant 0 : i32
    return %c0_i32, %c0_i32_0 : i32, i32
  }
}

</mosaic_0001>

<llo_original>
// kernel: tpu_custom_call.1
$region0: #{tpu_custom_call.1}
  #allocation0 [shape = 'u32[]', space=smem, size = 0x4, offset = 0x4, fixed_abs, tag = 'smem constant byte address 0x4 - core index']
  #allocation1 [shape = 'u32[144,128]{1,0:T(1,128)}', space=vmem, size = 0x12000, scoped, tag = 'internal scratch']
  #allocation2 [shape = 'f32[8,8,512]{2,1,0:T(8,128)}', space=vmem, size = 0x20000, scoped, tag = 'scratch operand']
  #allocation3 [shape = 'f32[8,128]{1,0:T(8,128)}', space=vmem, size = 0x1000, scoped, tag = 'scratch operand']
  #allocation4 [shape = 'f32[8,128]{1,0:T(8,128)}', space=vmem, size = 0x1000, scoped, tag = 'scratch operand']
  %s0 = inlined_call_operand.hbm [shape: f32[8,8,8], index: 0, kind: input, shape index: {}]
  %s1 = inlined_call_operand.hbm [shape: f32[8,512], index: 1, kind: input, shape index: {}]
  %s2 = inlined_call_operand.hbm [shape: f32[128,512], index: 2, kind: input, shape index: {}]
  %s3 = inlined_call_operand.vmem [shape: f32[1,512], index: 3, kind: input, shape index: {}]
  %s4 = inlined_call_operand.hbm [shape: f32[8,128], index: 4, kind: output, shape index: {}]
  %s5 = sld [smem:[#allocation0]]
  $region42: #{tpu_custom_call.1} parent=0
    _
  %s7 = ssub.s32 1, %s5
  %s8 = scalar_select 0, %s7, %s5
  $region1: #{tpu_custom_call.1} parent=0
    #allocation5 [shape = 'u8[32768]{0}', space=vmem, size = 0x8000, scoped, tag = 'input window, operand 0, single buffered']
    #allocation6 [shape = 's32[1]{0}', space=sflag, size = 0x4, scoped, tag = 'scoped memory for tpu_custom_call.1']
    #allocation7 [shape = 's32[1]{0}', space=sflag, size = 0x4, scoped, tag = 'scoped memory for tpu_custom_call.1']
    #allocation8 [shape = 'u8[16384]{0}', space=vmem, size = 0x4000, scoped, tag = 'input window, operand 1, single buffered']
    #allocation9 [shape = 's32[1]{0}', space=sflag, size = 0x4, scoped, tag = 'scoped memory for tpu_custom_call.1']
    #allocation10 [shape = 'u8[262144]{0}', space=vmem, size = 0x40000, scoped, tag = 'input window, operand 2, single buffered']
    #allocation11 [shape = 'u8[4096]{0}', space=vmem, size = 0x1000, scoped, tag = 'output window, operand 0, single buffered']
    %9 = vsyncpa [#allocation6], 0
    %10 = vsyncpa [#allocation9], 0
    %11 = vsyncpa [#allocation7], 0
    // Predicated region
    $region2: #{tpu_custom_call.1} parent=1 // pred_check
      _
    $region3: #{tpu_custom_call.1} parent=1 // pred_check_branch
      %13 = sbr.rel (0) target = $region5
    $region4: #{tpu_custom_call.1} parent=1 // pred_region
      %s15 = ssub.s32 1024, 1024
      %16 = vsyncadd [#allocation6], %s15
      %s17 = sshll.u32 [#allocation5], 4
      %s18 = int_to_ptr.vmem [resolvable:$true] %s17
      %23 = dma.hbm_to_vmem [thread:$0]  %s0, 1024, %s18, [#allocation6], 128, 128, 8
    $region5: #{tpu_custom_call.1} parent=1 // pred_fallthru
      _
    // Predicated region
    $region6: #{tpu_custom_call.1} parent=1 // pred_check
      _
    $region7: #{tpu_custom_call.1} parent=1 // pred_check_branch
      %25 = sbr.rel (0) target = $region9
    $region8: #{tpu_custom_call.1} parent=1 // pred_region
      %s27 = ssub.s32 512, 512
      %28 = vsyncadd [#allocation9], %s27
      %s30 = sshll.u32 [#allocation8], 4
      %s31 = int_to_ptr.vmem [resolvable:$true] %s30
      %33 = dma.hbm_to_vmem [thread:$0]  %s1, 512, %s31, [#allocation9]
    $region9: #{tpu_custom_call.1} parent=1 // pred_fallthru
      _
    // Predicated region
    $region10: #{tpu_custom_call.1} parent=1 // pred_check
      _
    $region11: #{tpu_custom_call.1} parent=1 // pred_check_branch
      %35 = sbr.rel (0) target = $region13
    $region12: #{tpu_custom_call.1} parent=1 // pred_region
      %s37 = ssub.s32 8192, 8192
      %38 = vsyncadd [#allocation9], %s37
      %s39 = sshll.u32 [#allocation10], 4
      %s40 = int_to_ptr.vmem [resolvable:$true] %s39
      %45 = dma.hbm_to_vmem [thread:$0]  %s2, 8192, %s40, [#allocation9], 512, 512, 32
    $region13: #{tpu_custom_call.1} parent=1 // pred_fallthru
      _
    // Predicated region
    $region14: #{tpu_custom_call.1} parent=1 // pred_check
      _
    $region15: #{tpu_custom_call.1} parent=1 // pred_check_branch
      %47 = sbr.rel (0) target = $region17
    $region16: #{tpu_custom_call.1} parent=1 // pred_region
      _
    $region17: #{tpu_custom_call.1} parent=1 // pred_fallthru
      _
    // Predicated region
    $region18: #{tpu_custom_call.1} parent=1 // pred_check
      _
    $region19: #{tpu_custom_call.1} parent=1 // pred_check_branch
      %49 = sbr.rel (0) target = $region21
    $region20: #{tpu_custom_call.1} parent=1 // pred_region
      %50 = dma.done [#allocation6], 1024
    $region21: #{tpu_custom_call.1} parent=1 // pred_fallthru
      _
    // Predicated region
    $region22: #{tpu_custom_call.1} parent=1 // pred_check
      _
    $region23: #{tpu_custom_call.1} parent=1 // pred_check_branch
      %52 = sbr.rel (0) target = $region25
    $region24: #{tpu_custom_call.1} parent=1 // pred_region
      %53 = dma.done [#allocation9], 512
    $region25: #{tpu_custom_call.1} parent=1 // pred_fallthru
      _
    // Predicated region
    $region26: #{tpu_custom_call.1} parent=1 // pred_check
      _
    $region27: #{tpu_custom_call.1} parent=1 // pred_check_branch
      %55 = sbr.rel (0) target = $region29
    $region28: #{tpu_custom_call.1} parent=1 // pred_region
      %56 = dma.done [#allocation9], 8192
    $region29: #{tpu_custom_call.1} parent=1 // pred_fallthru
      _
    %p57 = scmp.eq.s32.totalorder 0, 0
    // Predicated region
    $region30: #{tpu_custom_call.1} parent=1 // pred_check
      %p58 = pneg %p57
    $region31: #{tpu_custom_call.1} parent=1 // pred_check_branch
      %60 = sbr.rel (%p58) target = $region33
    $region32: #{tpu_custom_call.1} parent=1 // pred_region
      %61 = vst [vmem:[#allocation3] sm:$0xff] 0.0
      %62 = vst [vmem:[#allocation4] sm:$0xff] 0.0
    $region33: #{tpu_custom_call.1} parent=1 // pred_fallthru
      _
    %v63 = vld [vmem:[#allocation5] sm:$0xff]
    %v64 = vld [vmem:[#allocation5 + $0x8] sm:$0xff]
    %v65 = vld [vmem:[#allocation5 + $0x10] sm:$0xff]
    %v66 = vld [vmem:[#allocation5 + $0x18] sm:$0xff]
    %v67 = vld [vmem:[#allocation5 + $0x20] sm:$0xff]
    %v68 = vld [vmem:[#allocation5 + $0x28] sm:$0xff]
    %v69 = vld [vmem:[#allocation5 + $0x30] sm:$0xff]
    %v70 = vld [vmem:[#allocation5 + $0x38] sm:$0xff]
    %v71 = vld [vmem:[#allocation8] sm:$0xff]
    %v72 = vld [vmem:[#allocation8 + $0x8] sm:$0xff]
    %v73 = vld [vmem:[#allocation8 + $0x10] sm:$0xff]
    %v74 = vld [vmem:[#allocation8 + $0x18] sm:$0xff]
    %vm75 = vcmask 64512
    %v77 = vsel %vm75, %v63, 0
    %v80 = vsel %vm75, %v64, 0
    %v83 = vsel %vm75, %v65, 0
    %v86 = vsel %vm75, %v66, 0
    %v89 = vsel %vm75, %v67, 0
    %v92 = vsel %vm75, %v68, 0
    %v95 = vsel %vm75, %v69, 0
    %v98 = vsel %vm75, %v70, 0
    %100 = vmatprep.subr.mxu0 %v72
    %101 = vmatpush1.msra.mxu0 %v71
    %102 = vmatprep.subr.mxu0 0.0
    %103 = vmatpush1.msra.mxu0 0.0
    %104 = vmatprep.subr.mxu0 0.0
    %105 = vmatpush1.msra.mxu0 0.0
    %106 = vmatprep.subr.mxu0 0.0
    %107 = vmatpush1.msra.mxu0 0.0
    %108 = vmatprep.subr.mxu0 0.0
    %109 = vmatpush1.msra.mxu0 0.0
    %110 = vmatprep.subr.mxu0 0.0
    %111 = vmatpush1.msra.mxu0 0.0
    %112 = vmatprep.subr.mxu0 0.0
    %113 = vmatpush1.msra.mxu0 0.0
    %114 = vmatprep.subr.mxu0 0.0
    %115 = vmatpush1.msra.mxu0 0.0
    %116 = vmatprep.subr.mxu0 0.0
    %117 = vmatpush1.msra.mxu0 0.0
    %118 = vmatprep.subr.mxu0 0.0
    %119 = vmatpush1.msra.mxu0 0.0
    %120 = vmatprep.subr.mxu0 0.0
    %121 = vmatpush1.msra.mxu0 0.0
    %122 = vmatprep.subr.mxu0 0.0
    %123 = vmatpush1.msra.mxu0 0.0
    %124 = vmatprep.subr.mxu0 0.0
    %125 = vmatpush1.msra.mxu0 0.0
    %126 = vmatprep.subr.mxu0 0.0
    %127 = vmatpush1.msra.mxu0 0.0
    %128 = vmatprep.subr.mxu0 0.0
    %129 = vmatpush1.msra.mxu0 0.0
    %130 = vmatprep.subr.mxu0 0.0
    %131 = vmatpush1.msra.mxu0 0.0
    %132 = vmatprep.subr.mxu0 0.0
    %133 = vmatpush1.msra.mxu0 0.0
    %134 = vmatprep.subr.mxu0 0.0
    %135 = vmatpush1.msra.mxu0 0.0
    %136 = vmatprep.subr.mxu0 0.0
    %137 = vmatpush1.msra.mxu0 0.0
    %138 = vmatprep.subr.mxu0 0.0
    %139 = vmatpush1.msra.mxu0 0.0
    %140 = vmatprep.subr.mxu0 0.0
    %141 = vmatpush1.msra.mxu0 0.0
    %142 = vmatprep.subr.mxu0 0.0
    %143 = vmatpush1.msra.mxu0 0.0
    %144 = vmatprep.subr.mxu0 0.0
    %145 = vmatpush1.msra.mxu0 0.0
    %146 = vmatprep.subr.mxu0 0.0
    %147 = vmatpush1.msra.mxu0 0.0
    %148 = vmatprep.subr.mxu0 0.0
    %149 = vmatpush1.msra.mxu0 0.0
    %150 = vmatprep.subr.mxu0 0.0
    %151 = vmatpush1.msra.mxu0 0.0
    %152 = vmatprep.subr.mxu0 0.0
    %153 = vmatpush1.msra.mxu0 0.0
    %154 = vmatprep.subr.mxu0 0.0
    %155 = vmatpush1.msra.mxu0 0.0
    %156 = vmatprep.subr.mxu0 0.0
    %157 = vmatpush1.msra.mxu0 0.0
    %158 = vmatprep.subr.mxu0 0.0
    %159 = vmatpush1.msra.mxu0 0.0
    %160 = vmatprep.subr.mxu0 0.0
    %161 = vmatpush1.msra.mxu0 0.0
    %162 = vmatprep.subr.mxu0 0.0
    %163 = vmatpush1.msra.mxu0 0.0
    %164 = vmatprep.mubr.f32.mxu0 0.0
    %165 = vmatmul.mubr.f32.gmra.mrb[0].mxu0 %v77
    %v166 = vpop.f32.mrb[0].mxu0
    %v167 = vadd.f32 0.0, %v166
    %v168 = vpop.f32.mrb[0].mxu0
    %v169 = vadd.f32 0.0, %v168
    %170 = vmatprep.mubr.f32.mxu0 0.0
    %171 = vmatmul.mubr.f32.gmra.mrb[0].mxu0 %v80
    %v172 = vpop.f32.mrb[0].mxu0
    %v173 = vadd.f32 0.0, %v172
    %v174 = vpop.f32.mrb[0].mxu0
    %v175 = vadd.f32 0.0, %v174
    %176 = vmatprep.mubr.f32.mxu0 0.0
    %177 = vmatmul.mubr.f32.gmra.mrb[0].mxu0 %v83
    %v178 = vpop.f32.mrb[0].mxu0
    %v179 = vadd.f32 0.0, %v178
    %v180 = vpop.f32.mrb[0].mxu0
    %v181 = vadd.f32 0.0, %v180
    %182 = vmatprep.mubr.f32.mxu0 0.0
    %183 = vmatmul.mubr.f32.gmra.mrb[0].mxu0 %v86
    %v184 = vpop.f32.mrb[0].mxu0
    %v185 = vadd.f32 0.0, %v184
    %v186 = vpop.f32.mrb[0].mxu0
    %v187 = vadd.f32 0.0, %v186
    %188 = vmatprep.mubr.f32.mxu0 0.0
    %189 = vmatmul.mubr.f32.gmra.mrb[0].mxu0 %v89
    %v190 = vpop.f32.mrb[0].mxu0
    %v191 = vadd.f32 0.0, %v190
    %v192 = vpop.f32.mrb[0].mxu0
    %v193 = vadd.f32 0.0, %v192
    %194 = vmatprep.mubr.f32.mxu0 0.0
    %195 = vmatmul.mubr.f32.gmra.mrb[0].mxu0 %v92
    %v196 = vpop.f32.mrb[0].mxu0
    %v197 = vadd.f32 0.0, %v196
    %v198 = vpop.f32.mrb[0].mxu0
    %v199 = vadd.f32 0.0, %v198
    %200 = vmatprep.mubr.f32.mxu0 0.0
    %201 = vmatmul.mubr.f32.gmra.mrb[0].mxu0 %v95
    %v202 = vpop.f32.mrb[0].mxu0
    %v203 = vadd.f32 0.0, %v202
    %v204 = vpop.f32.mrb[0].mxu0
    %v205 = vadd.f32 0.0, %v204
    %206 = vmatprep.mubr.f32.mxu0 0.0
    %207 = vmatmul.mubr.f32.gmra.mrb[0].mxu0 %v98
    %v208 = vpop.f32.mrb[0].mxu0
    %v209 = vadd.f32 0.0, %v208
    %v210 = vpop.f32.mrb[0].mxu0
    %v211 = vadd.f32 0.0, %v210
    %212 = vdwg.mxu0
    %213 = vmatprep.subr.mxu0 %v74
    %214 = vmatpush1.msra.mxu0 %v73
    %215 = vmatprep.subr.mxu0 0.0
    %216 = vmatpush1.msra.mxu0 0.0
    %217 = vmatprep.subr.mxu0 0.0
    %218 = vmatpush1.msra.mxu0 0.0
    %219 = vmatprep.subr.mxu0 0.0
    %220 = vmatpush1.msra.mxu0 0.0
    %221 = vmatprep.subr.mxu0 0.0
    %222 = vmatpush1.msra.mxu0 0.0
    %223 = vmatprep.subr.mxu0 0.0
    %224 = vmatpush1.msra.mxu0 0.0
    %225 = vmatprep.subr.mxu0 0.0
    %226 = vmatpush1.msra.mxu0 0.0
    %227 = vmatprep.subr.mxu0 0.0
    %228 = vmatpush1.msra.mxu0 0.0
    %229 = vmatprep.subr.mxu0 0.0
    %230 = vmatpush1.msra.mxu0 0.0
    %231 = vmatprep.subr.mxu0 0.0
    %232 = vmatpush1.msra.mxu0 0.0
    %233 = vmatprep.subr.mxu0 0.0
    %234 = vmatpush1.msra.mxu0 0.0
    %235 = vmatprep.subr.mxu0 0.0
    %236 = vmatpush1.msra.mxu0 0.0
    %237 = vmatprep.subr.mxu0 0.0
    %238 = vmatpush1.msra.mxu0 0.0
    %239 = vmatprep.subr.mxu0 0.0
    %240 = vmatpush1.msra.mxu0 0.0
    %241 = vmatprep.subr.mxu0 0.0
    %242 = vmatpush1.msra.mxu0 0.0
    %243 = vmatprep.subr.mxu0 0.0
    %244 = vmatpush1.msra.mxu0 0.0
    %245 = vmatprep.subr.mxu0 0.0
    %246 = vmatpush1.msra.mxu0 0.0
    %247 = vmatprep.subr.mxu0 0.0
    %248 = vmatpush1.msra.mxu0 0.0
    %249 = vmatprep.subr.mxu0 0.0
    %250 = vmatpush1.msra.mxu0 0.0
    %251 = vmatprep.subr.mxu0 0.0
    %252 = vmatpush1.msra.mxu0 0.0
    %253 = vmatprep.subr.mxu0 0.0
    %254 = vmatpush1.msra.mxu0 0.0
    %255 = vmatprep.subr.mxu0 0.0
    %256 = vmatpush1.msra.mxu0 0.0
    %257 = vmatprep.subr.mxu0 0.0
    %258 = vmatpush1.msra.mxu0 0.0
    %259 = vmatprep.subr.mxu0 0.0
    %260 = vmatpush1.msra.mxu0 0.0
    %261 = vmatprep.subr.mxu0 0.0
    %262 = vmatpush1.msra.mxu0 0.0
    %263 = vmatprep.subr.mxu0 0.0
    %264 = vmatpush1.msra.mxu0 0.0
    %265 = vmatprep.subr.mxu0 0.0
    %266 = vmatpush1.msra.mxu0 0.0
    %267 = vmatprep.subr.mxu0 0.0
    %268 = vmatpush1.msra.mxu0 0.0
    %269 = vmatprep.subr.mxu0 0.0
    %270 = vmatpush1.msra.mxu0 0.0
    %271 = vmatprep.subr.mxu0 0.0
    %272 = vmatpush1.msra.mxu0 0.0
    %273 = vmatprep.subr.mxu0 0.0
    %274 = vmatpush1.msra.mxu0 0.0
    %275 = vmatprep.subr.mxu0 0.0
    %276 = vmatpush1.msra.mxu0 0.0
    %277 = vmatprep.mubr.f32.mxu0 0.0
    %278 = vmatmul.mubr.f32.gmra.mrb[0].mxu0 %v77
    %v279 = vpop.f32.mrb[0].mxu0
    %v280 = vadd.f32 0.0, %v279
    %v281 = vpop.f32.mrb[0].mxu0
    %v282 = vadd.f32 0.0, %v281
    %283 = vmatprep.mubr.f32.mxu0 0.0
    %284 = vmatmul.mubr.f32.gmra.mrb[0].mxu0 %v80
    %v285 = vpop.f32.mrb[0].mxu0
    %v286 = vadd.f32 0.0, %v285
    %v287 = vpop.f32.mrb[0].mxu0
    %v288 = vadd.f32 0.0, %v287
    %289 = vmatprep.mubr.f32.mxu0 0.0
    %290 = vmatmul.mubr.f32.gmra.mrb[0].mxu0 %v83
    %v291 = vpop.f32.mrb[0].mxu0
    %v292 = vadd.f32 0.0, %v291
    %v293 = vpop.f32.mrb[0].mxu0
    %v294 = vadd.f32 0.0, %v293
    %295 = vmatprep.mubr.f32.mxu0 0.0
    %296 = vmatmul.mubr.f32.gmra.mrb[0].mxu0 %v86
    %v297 = vpop.f32.mrb[0].mxu0
    %v298 = vadd.f32 0.0, %v297
    %v299 = vpop.f32.mrb[0].mxu0
    %v300 = vadd.f32 0.0, %v299
    %301 = vmatprep.mubr.f32.mxu0 0.0
    %302 = vmatmul.mubr.f32.gmra.mrb[0].mxu0 %v89
    %v303 = vpop.f32.mrb[0].mxu0
    %v304 = vadd.f32 0.0, %v303
    %v305 = vpop.f32.mrb[0].mxu0
    %v306 = vadd.f32 0.0, %v305
    %307 = vmatprep.mubr.f32.mxu0 0.0
    %308 = vmatmul.mubr.f32.gmra.mrb[0].mxu0 %v92
    %v309 = vpop.f32.mrb[0].mxu0
    %v310 = vadd.f32 0.0, %v309
    %v311 = vpop.f32.mrb[0].mxu0
    %v312 = vadd.f32 0.0, %v311
    %313 = vmatprep.mubr.f32.mxu0 0.0
    %314 = vmatmul.mubr.f32.gmra.mrb[0].mxu0 %v95
    %v315 = vpop.f32.mrb[0].mxu0
    %v316 = vadd.f32 0.0, %v315
    %v317 = vpop.f32.mrb[0].mxu0
    %v318 = vadd.f32 0.0, %v317
    %319 = vmatprep.mubr.f32.mxu0 0.0
    %320 = vmatmul.mubr.f32.gmra.mrb[0].mxu0 %v98
    %v321 = vpop.f32.mrb[0].mxu0
    %v322 = vadd.f32 0.0, %v321
    %v323 = vpop.f32.mrb[0].mxu0
    %v324 = vadd.f32 0.0, %v323
    %325 = vdwg.mxu0
    %v326 = vld [vmem:[%s3] sm:$0xf]
    %v328 = vlaneseq
    %v329 = vshrl.u32 %v328, 7
    %v330 = vsub.s32 0, %v329
    %v331 = vrot.slane %v326, %v330
    %v332 = vlaneseq
    %v333 = vshrl.u32 %v332, 7
    %v334 = vsub.s32 1, %v333
    %v335 = vrot.slane %v326, %v334
    %v336 = vlaneseq
    %v337 = vshrl.u32 %v336, 7
    %v338 = vsub.s32 2, %v337
    %v339 = vrot.slane %v326, %v338
    %v340 = vlaneseq
    %v341 = vshrl.u32 %v340, 7
    %v342 = vsub.s32 3, %v341
    %v343 = vrot.slane %v326, %v342
    %v348 = vadd.f32 %v167, %v331
    %v349 = vadd.f32 %v169, %v335
    %v350 = vadd.f32 %v280, %v339
    %v351 = vadd.f32 %v282, %v343
    %v352 = vadd.f32 %v173, %v331
    %v353 = vadd.f32 %v175, %v335
    %v354 = vadd.f32 %v286, %v339
    %v355 = vadd.f32 %v288, %v343
    %v356 = vadd.f32 %v179, %v331
    %v357 = vadd.f32 %v181, %v335
    %v358 = vadd.f32 %v292, %v339
    %v359 = vadd.f32 %v294, %v343
    %v360 = vadd.f32 %v185, %v331
    %v361 = vadd.f32 %v187, %v335
    %v362 = vadd.f32 %v298, %v339
    %v363 = vadd.f32 %v300, %v343
    %v364 = vadd.f32 %v191, %v331
    %v365 = vadd.f32 %v193, %v335
    %v366 = vadd.f32 %v304, %v339
    %v367 = vadd.f32 %v306, %v343
    %v368 = vadd.f32 %v197, %v331
    %v369 = vadd.f32 %v199, %v335
    %v370 = vadd.f32 %v310, %v339
    %v371 = vadd.f32 %v312, %v343
    %v372 = vadd.f32 %v203, %v331
    %v373 = vadd.f32 %v205, %v335
    %v374 = vadd.f32 %v316, %v339
    %v375 = vadd.f32 %v318, %v343
    %v376 = vadd.f32 %v209, %v331
    %v377 = vadd.f32 %v211, %v335
    %v378 = vadd.f32 %v322, %v339
    %v379 = vadd.f32 %v324, %v343
    %380 = vst [vmem:[#allocation2] sm:$0xff] %v348
    %381 = vst [vmem:[#allocation2 + $0x8] sm:$0xff] %v349
    %382 = vst [vmem:[#allocation2 + $0x10] sm:$0xff] %v350
    %383 = vst [vmem:[#allocation2 + $0x18] sm:$0xff] %v351
    %384 = vst [vmem:[#allocation2 + $0x20] sm:$0xff] %v352
    %385 = vst [vmem:[#allocation2 + $0x28] sm:$0xff] %v353
    %386 = vst [vmem:[#allocation2 + $0x30] sm:$0xff] %v354
    %387 = vst [vmem:[#allocation2 + $0x38] sm:$0xff] %v355
    %388 = vst [vmem:[#allocation2 + $0x40] sm:$0xff] %v356
    %389 = vst [vmem:[#allocation2 + $0x48] sm:$0xff] %v357
    %390 = vst [vmem:[#allocation2 + $0x50] sm:$0xff] %v358
    %391 = vst [vmem:[#allocation2 + $0x58] sm:$0xff] %v359
    %392 = vst [vmem:[#allocation2 + $0x60] sm:$0xff] %v360
    %393 = vst [vmem:[#allocation2 + $0x68] sm:$0xff] %v361
    %394 = vst [vmem:[#allocation2 + $0x70] sm:$0xff] %v362
    %395 = vst [vmem:[#allocation2 + $0x78] sm:$0xff] %v363
    %396 = vst [vmem:[#allocation2 + $0x80] sm:$0xff] %v364
    %397 = vst [vmem:[#allocation2 + $0x88] sm:$0xff] %v365
    %398 = vst [vmem:[#allocation2 + $0x90] sm:$0xff] %v366
    %399 = vst [vmem:[#allocation2 + $0x98] sm:$0xff] %v367
    %400 = vst [vmem:[#allocation2 + $0xa0] sm:$0xff] %v368
    %401 = vst [vmem:[#allocation2 + $0xa8] sm:$0xff] %v369
    %402 = vst [vmem:[#allocation2 + $0xb0] sm:$0xff] %v370
    %403 = vst [vmem:[#allocation2 + $0xb8] sm:$0xff] %v371
    %404 = vst [vmem:[#allocation2 + $0xc0] sm:$0xff] %v372
    %405 = vst [vmem:[#allocation2 + $0xc8] sm:$0xff] %v373
    %406 = vst [vmem:[#allocation2 + $0xd0] sm:$0xff] %v374
    %407 = vst [vmem:[#allocation2 + $0xd8] sm:$0xff] %v375
    %408 = vst [vmem:[#allocation2 + $0xe0] sm:$0xff] %v376
    %409 = vst [vmem:[#allocation2 + $0xe8] sm:$0xff] %v377
    %410 = vst [vmem:[#allocation2 + $0xf0] sm:$0xff] %v378
    %411 = vst [vmem:[#allocation2 + $0xf8] sm:$0xff] %v379
    %v412 = vld [vmem:[#allocation3] sm:$0xff]
    %v413 = vld [vmem:[#allocation4] sm:$0xff]
    %v414 = vld [vmem:[#allocation2] sm:$0xff]
    %v415 = vld [vmem:[#allocation2 + $0x8] sm:$0xff]
    %v416 = vld [vmem:[#allocation2 + $0x10] sm:$0xff]
    %v417 = vld [vmem:[#allocation2 + $0x18] sm:$0xff]
    %v418 = vld [vmem:[#allocation10] sm:$0xff]
    %v419 = vld [vmem:[#allocation10 + $0x8] sm:$0xff]
    %v420 = vld [vmem:[#allocation10 + $0x10] sm:$0xff]
    %v421 = vld [vmem:[#allocation10 + $0x18] sm:$0xff]
    %v422 = vld [vmem:[#allocation10 + $0x20] sm:$0xff]
    %v423 = vld [vmem:[#allocation10 + $0x28] sm:$0xff]
    %v424 = vld [vmem:[#allocation10 + $0x30] sm:$0xff]
    %v425 = vld [vmem:[#allocation10 + $0x38] sm:$0xff]
    %v426 = vld [vmem:[#allocation10 + $0x40] sm:$0xff]
    %v427 = vld [vmem:[#allocation10 + $0x48] sm:$0xff]
    %v428 = vld [vmem:[#allocation10 + $0x50] sm:$0xff]
    %v429 = vld [vmem:[#allocation10 + $0x58] sm:$0xff]
    %v430 = vld [vmem:[#allocation10 + $0x60] sm:$0xff]
    %v431 = vld [vmem:[#allocation10 + $0x68] sm:$0xff]
    %v432 = vld [vmem:[#allocation10 + $0x70] sm:$0xff]
    %v433 = vld [vmem:[#allocation10 + $0x78] sm:$0xff]
    %v434 = vld [vmem:[#allocation10 + $0x80] sm:$0xff]
    %v435 = vld [vmem:[#allocation10 + $0x88] sm:$0xff]
    %v436 = vld [vmem:[#allocation10 + $0x90] sm:$0xff]
    %v437 = vld [vmem:[#allocation10 + $0x98] sm:$0xff]
    %v438 = vld [vmem:[#allocation10 + $0xa0] sm:$0xff]
    %v439 = vld [vmem:[#allocation10 + $0xa8] sm:$0xff]
    %v440 = vld [vmem:[#allocation10 + $0xb0] sm:$0xff]
    %v441 = vld [vmem:[#allocation10 + $0xb8] sm:$0xff]
    %v442 = vld [vmem:[#allocation10 + $0xc0] sm:$0xff]
    %v443 = vld [vmem:[#allocation10 + $0xc8] sm:$0xff]
    %v444 = vld [vmem:[#allocation10 + $0xd0] sm:$0xff]
    %v445 = vld [vmem:[#allocation10 + $0xd8] sm:$0xff]
    %v446 = vld [vmem:[#allocation10 + $0xe0] sm:$0xff]
    %v447 = vld [vmem:[#allocation10 + $0xe8] sm:$0xff]
    %v448 = vld [vmem:[#allocation10 + $0xf0] sm:$0xff]
    %v449 = vld [vmem:[#allocation10 + $0xf8] sm:$0xff]
    %v450 = vld [vmem:[#allocation10 + $0x100] sm:$0xff]
    %v451 = vld [vmem:[#allocation10 + $0x108] sm:$0xff]
    %v452 = vld [vmem:[#allocation10 + $0x110] sm:$0xff]
    %v453 = vld [vmem:[#allocation10 + $0x118] sm:$0xff]
    %v454 = vld [vmem:[#allocation10 + $0x120] sm:$0xff]
    %v455 = vld [vmem:[#allocation10 + $0x128] sm:$0xff]
    %v456 = vld [vmem:[#allocation10 + $0x130] sm:$0xff]
    %v457 = vld [vmem:[#allocation10 + $0x138] sm:$0xff]
    %v458 = vld [vmem:[#allocation10 + $0x140] sm:$0xff]
    %v459 = vld [vmem:[#allocation10 + $0x148] sm:$0xff]
    %v460 = vld [vmem:[#allocation10 + $0x150] sm:$0xff]
    %v461 = vld [vmem:[#allocation10 + $0x158] sm:$0xff]
    %v462 = vld [vmem:[#allocation10 + $0x160] sm:$0xff]
    %v463 = vld [vmem:[#allocation10 + $0x168] sm:$0xff]
    %v464 = vld [vmem:[#allocation10 + $0x170] sm:$0xff]
    %v465 = vld [vmem:[#allocation10 + $0x178] sm:$0xff]
    %v466 = vld [vmem:[#allocation10 + $0x180] sm:$0xff]
    %v467 = vld [vmem:[#allocation10 + $0x188] sm:$0xff]
    %v468 = vld [vmem:[#allocation10 + $0x190] sm:$0xff]
    %v469 = vld [vmem:[#allocation10 + $0x198] sm:$0xff]
    %v470 = vld [vmem:[#allocation10 + $0x1a0] sm:$0xff]
    %v471 = vld [vmem:[#allocation10 + $0x1a8] sm:$0xff]
    %v472 = vld [vmem:[#allocation10 + $0x1b0] sm:$0xff]
    %v473 = vld [vmem:[#allocation10 + $0x1b8] sm:$0xff]
    %v474 = vld [vmem:[#allocation10 + $0x1c0] sm:$0xff]
    %v475 = vld [vmem:[#allocation10 + $0x1c8] sm:$0xff]
    %v476 = vld [vmem:[#allocation10 + $0x1d0] sm:$0xff]
    %v477 = vld [vmem:[#allocation10 + $0x1d8] sm:$0xff]
    %v478 = vld [vmem:[#allocation10 + $0x1e0] sm:$0xff]
    %v479 = vld [vmem:[#allocation10 + $0x1e8] sm:$0xff]
    %v480 = vld [vmem:[#allocation10 + $0x1f0] sm:$0xff]
    %v481 = vld [vmem:[#allocation10 + $0x1f8] sm:$0xff]
    %482 = vmatprep.subr.mxu0 %v419
    %483 = vmatpush1.msra.mxu0 %v418
    %484 = vmatprep.subr.mxu0 %v423
    %485 = vmatpush1.msra.mxu0 %v422
    %486 = vmatprep.subr.mxu0 %v427
    %487 = vmatpush1.msra.mxu0 %v426
    %488 = vmatprep.subr.mxu0 %v431
    %489 = vmatpush1.msra.mxu0 %v430
    %490 = vmatprep.subr.mxu0 %v435
    %491 = vmatpush1.msra.mxu0 %v434
    %492 = vmatprep.subr.mxu0 %v439
    %493 = vmatpush1.msra.mxu0 %v438
    %494 = vmatprep.subr.mxu0 %v443
    %495 = vmatpush1.msra.mxu0 %v442
    %496 = vmatprep.subr.mxu0 %v447
    %497 = vmatpush1.msra.mxu0 %v446
    %498 = vmatprep.subr.mxu0 %v451
    %499 = vmatpush1.msra.mxu0 %v450
    %500 = vmatprep.subr.mxu0 %v455
    %501 = vmatpush1.msra.mxu0 %v454
    %502 = vmatprep.subr.mxu0 %v459
    %503 = vmatpush1.msra.mxu0 %v458
    %504 = vmatprep.subr.mxu0 %v463
    %505 = vmatpush1.msra.mxu0 %v462
    %506 = vmatprep.subr.mxu0 %v467
    %507 = vmatpush1.msra.mxu0 %v466
    %508 = vmatprep.subr.mxu0 %v471
    %509 = vmatpush1.msra.mxu0 %v470
    %510 = vmatprep.subr.mxu0 %v475
    %511 = vmatpush1.msra.mxu0 %v474
    %512 = vmatprep.subr.mxu0 %v479
    %513 = vmatpush1.msra.mxu0 %v478
    %514 = vmatprep.subr.mxu0 0.0
    %515 = vmatpush1.msra.mxu0 0.0
    %516 = vmatprep.subr.mxu0 0.0
    %517 = vmatpush1.msra.mxu0 0.0
    %518 = vmatprep.subr.mxu0 0.0
    %519 = vmatpush1.msra.mxu0 0.0
    %520 = vmatprep.subr.mxu0 0.0
    %521 = vmatpush1.msra.mxu0 0.0
    %522 = vmatprep.subr.mxu0 0.0
    %523 = vmatpush1.msra.mxu0 0.0
    %524 = vmatprep.subr.mxu0 0.0
    %525 = vmatpush1.msra.mxu0 0.0
    %526 = vmatprep.subr.mxu0 0.0
    %527 = vmatpush1.msra.mxu0 0.0
    %528 = vmatprep.subr.mxu0 0.0
    %529 = vmatpush1.msra.mxu0 0.0
    %530 = vmatprep.subr.mxu0 0.0
    %531 = vmatpush1.msra.mxu0 0.0
    %532 = vmatprep.subr.mxu0 0.0
    %533 = vmatpush1.msra.mxu0 0.0
    %534 = vmatprep.subr.mxu0 0.0
    %535 = vmatpush1.msra.mxu0 0.0
    %536 = vmatprep.subr.mxu0 0.0
    %537 = vmatpush1.msra.mxu0 0.0
    %538 = vmatprep.subr.mxu0 0.0
    %539 = vmatpush1.msra.mxu0 0.0
    %540 = vmatprep.subr.mxu0 0.0
    %541 = vmatpush1.msra.mxu0 0.0
    %542 = vmatprep.subr.mxu0 0.0
    %543 = vmatpush1.msra.mxu0 0.0
    %544 = vmatprep.subr.mxu0 0.0
    %545 = vmatpush1.msra.mxu0 0.0
    %546 = vmatprep.mubr.f32.mxu0 0.0
    %547 = vmatmul.mubr.f32.gmra.mrb[0].mxu0 %v412
    %v548 = vpop.f32.mrb[0].mxu0
    %v549 = vadd.f32 0.0, %v548
    %v550 = vpop.f32.mrb[0].mxu0
    %v551 = vadd.f32 0.0, %v550
    %552 = vdwg.mxu0
    %553 = vmatprep.subr.mxu0 %v421
    %554 = vmatpush1.msra.mxu0 %v420
    %555 = vmatprep.subr.mxu0 %v425
    %556 = vmatpush1.msra.mxu0 %v424
    %557 = vmatprep.subr.mxu0 %v429
    %558 = vmatpush1.msra.mxu0 %v428
    %559 = vmatprep.subr.mxu0 %v433
    %560 = vmatpush1.msra.mxu0 %v432
    %561 = vmatprep.subr.mxu0 %v437
    %562 = vmatpush1.msra.mxu0 %v436
    %563 = vmatprep.subr.mxu0 %v441
    %564 = vmatpush1.msra.mxu0 %v440
    %565 = vmatprep.subr.mxu0 %v445
    %566 = vmatpush1.msra.mxu0 %v444
    %567 = vmatprep.subr.mxu0 %v449
    %568 = vmatpush1.msra.mxu0 %v448
    %569 = vmatprep.subr.mxu0 %v453
    %570 = vmatpush1.msra.mxu0 %v452
    %571 = vmatprep.subr.mxu0 %v457
    %572 = vmatpush1.msra.mxu0 %v456
    %573 = vmatprep.subr.mxu0 %v461
    %574 = vmatpush1.msra.mxu0 %v460
    %575 = vmatprep.subr.mxu0 %v465
    %576 = vmatpush1.msra.mxu0 %v464
    %577 = vmatprep.subr.mxu0 %v469
    %578 = vmatpush1.msra.mxu0 %v468
    %579 = vmatprep.subr.mxu0 %v473
    %580 = vmatpush1.msra.mxu0 %v472
    %581 = vmatprep.subr.mxu0 %v477
    %582 = vmatpush1.msra.mxu0 %v476
    %583 = vmatprep.subr.mxu0 %v481
    %584 = vmatpush1.msra.mxu0 %v480
    %585 = vmatprep.subr.mxu0 0.0
    %586 = vmatpush1.msra.mxu0 0.0
    %587 = vmatprep.subr.mxu0 0.0
    %588 = vmatpush1.msra.mxu0 0.0
    %589 = vmatprep.subr.mxu0 0.0
    %590 = vmatpush1.msra.mxu0 0.0
    %591 = vmatprep.subr.mxu0 0.0
    %592 = vmatpush1.msra.mxu0 0.0
    %593 = vmatprep.subr.mxu0 0.0
    %594 = vmatpush1.msra.mxu0 0.0
    %595 = vmatprep.subr.mxu0 0.0
    %596 = vmatpush1.msra.mxu0 0.0
    %597 = vmatprep.subr.mxu0 0.0
    %598 = vmatpush1.msra.mxu0 0.0
    %599 = vmatprep.subr.mxu0 0.0
    %600 = vmatpush1.msra.mxu0 0.0
    %601 = vmatprep.subr.mxu0 0.0
    %602 = vmatpush1.msra.mxu0 0.0
    %603 = vmatprep.subr.mxu0 0.0
    %604 = vmatpush1.msra.mxu0 0.0
    %605 = vmatprep.subr.mxu0 0.0
    %606 = vmatpush1.msra.mxu0 0.0
    %607 = vmatprep.subr.mxu0 0.0
    %608 = vmatpush1.msra.mxu0 0.0
    %609 = vmatprep.subr.mxu0 0.0
    %610 = vmatpush1.msra.mxu0 0.0
    %611 = vmatprep.subr.mxu0 0.0
    %612 = vmatpush1.msra.mxu0 0.0
    %613 = vmatprep.subr.mxu0 0.0
    %614 = vmatpush1.msra.mxu0 0.0
    %615 = vmatprep.subr.mxu0 0.0
    %616 = vmatpush1.msra.mxu0 0.0
    %617 = vmatprep.mubr.f32.mxu0 0.0
    %618 = vmatmul.mubr.f32.gmra.mrb[0].mxu0 %v412
    %v619 = vpop.f32.mrb[0].mxu0
    %v620 = vadd.f32 0.0, %v619
    %v621 = vpop.f32.mrb[0].mxu0
    %v622 = vadd.f32 0.0, %v621
    %623 = vdwg.mxu0
    %v624 = vadd.f32 %v414, %v549
    %v625 = vadd.f32 %v415, %v551
    %v626 = vadd.f32 %v416, %v620
    %v627 = vadd.f32 %v417, %v622
    %v628 = vxor.u32 %v624, 2147483648
    %v629 = vxor.u32 %v625, 2147483648
    %v630 = vxor.u32 %v626, 2147483648
    %v631 = vmul.f32 %v628, 1.442695
    %v632 = vpow.pop %v631
    %v633 = vmul.f32 %v629, 1.442695
    %v634 = vpow.pop %v633
    %v635 = vmul.f32 %v630, 1.442695
    %v636 = vpow.pop %v635
    %v637 = vadd.f32 %v632, 1.0
    %v638 = vadd.f32 %v634, 1.0
    %v639 = vadd.f32 %v636, 1.0
    %v640 = vrcp.pop %v637
    %v641 = vmul.f32 1.0, %v640
    %v642 = vrcp.pop %v638
    %v643 = vmul.f32 1.0, %v642
    %v644 = vrcp.pop %v639
    %v645 = vmul.f32 1.0, %v644
    %v646 = vtanh.pop %v627
    %v647 = vmul.f32 %v643, %v413
    %v648 = vmul.f32 %v641, %v646
    %v649 = vadd.f32 %v647, %v648
    %v650 = vtanh.pop %v649
    %v651 = vmul.f32 %v645, %v650
    %s652 = scalar_lea.vmem [#allocation2], 32
    %v653 = vld [vmem:[%s652] sm:$0xff]
    %v654 = vld [vmem:[%s652 + $0x8] sm:$0xff]
    %v655 = vld [vmem:[%s652 + $0x10] sm:$0xff]
    %v656 = vld [vmem:[%s652 + $0x18] sm:$0xff]
    %657 = vmatprep.subr.mxu0 %v419
    %658 = vmatpush1.msra.mxu0 %v418
    %659 = vmatprep.subr.mxu0 %v423
    %660 = vmatpush1.msra.mxu0 %v422
    %661 = vmatprep.subr.mxu0 %v427
    %662 = vmatpush1.msra.mxu0 %v426
    %663 = vmatprep.subr.mxu0 %v431
    %664 = vmatpush1.msra.mxu0 %v430
    %665 = vmatprep.subr.mxu0 %v435
    %666 = vmatpush1.msra.mxu0 %v434
    %667 = vmatprep.subr.mxu0 %v439
    %668 = vmatpush1.msra.mxu0 %v438
    %669 = vmatprep.subr.mxu0 %v443
    %670 = vmatpush1.msra.mxu0 %v442
    %671 = vmatprep.subr.mxu0 %v447
    %672 = vmatpush1.msra.mxu0 %v446
    %673 = vmatprep.subr.mxu0 %v451
    %674 = vmatpush1.msra.mxu0 %v450
    %675 = vmatprep.subr.mxu0 %v455
    %676 = vmatpush1.msra.mxu0 %v454
    %677 = vmatprep.subr.mxu0 %v459
    %678 = vmatpush1.msra.mxu0 %v458
    %679 = vmatprep.subr.mxu0 %v463
    %680 = vmatpush1.msra.mxu0 %v462
    %681 = vmatprep.subr.mxu0 %v467
    %682 = vmatpush1.msra.mxu0 %v466
    %683 = vmatprep.subr.mxu0 %v471
    %684 = vmatpush1.msra.mxu0 %v470
    %685 = vmatprep.subr.mxu0 %v475
    %686 = vmatpush1.msra.mxu0 %v474
    %687 = vmatprep.subr.mxu0 %v479
    %688 = vmatpush1.msra.mxu0 %v478
    %689 = vmatprep.subr.mxu0 0.0
    %690 = vmatpush1.msra.mxu0 0.0
    %691 = vmatprep.subr.mxu0 0.0
    %692 = vmatpush1.msra.mxu0 0.0
    %693 = vmatprep.subr.mxu0 0.0
    %694 = vmatpush1.msra.mxu0 0.0
    %695 = vmatprep.subr.mxu0 0.0
    %696 = vmatpush1.msra.mxu0 0.0
    %697 = vmatprep.subr.mxu0 0.0
    %698 = vmatpush1.msra.mxu0 0.0
    %699 = vmatprep.subr.mxu0 0.0
    %700 = vmatpush1.msra.mxu0 0.0
    %701 = vmatprep.subr.mxu0 0.0
    %702 = vmatpush1.msra.mxu0 0.0
    %703 = vmatprep.subr.mxu0 0.0
    %704 = vmatpush1.msra.mxu0 0.0
    %705 = vmatprep.subr.mxu0 0.0
    %706 = vmatpush1.msra.mxu0 0.0
    %707 = vmatprep.subr.mxu0 0.0
    %708 = vmatpush1.msra.mxu0 0.0
    %709 = vmatprep.subr.mxu0 0.0
    %710 = vmatpush1.msra.mxu0 0.0
    %711 = vmatprep.subr.mxu0 0.0
    %712 = vmatpush1.msra.mxu0 0.0
    %713 = vmatprep.subr.mxu0 0.0
    %714 = vmatpush1.msra.mxu0 0.0
    %715 = vmatprep.subr.mxu0 0.0
    %716 = vmatpush1.msra.mxu0 0.0
    %717 = vmatprep.subr.mxu0 0.0
    %718 = vmatpush1.msra.mxu0 0.0
    %719 = vmatprep.subr.mxu0 0.0
    %720 = vmatpush1.msra.mxu0 0.0
    %721 = vmatprep.mubr.f32.mxu0 0.0
    %722 = vmatmul.mubr.f32.gmra.mrb[0].mxu0 %v651
    %v723 = vpop.f32.mrb[0].mxu0
    %v724 = vadd.f32 0.0, %v723
    %v725 = vpop.f32.mrb[0].mxu0
    %v726 = vadd.f32 0.0, %v725
    %727 = vdwg.mxu0
    %728 = vmatprep.subr.mxu0 %v421
    %729 = vmatpush1.msra.mxu0 %v420
    %730 = vmatprep.subr.mxu0 %v425
    %731 = vmatpush1.msra.mxu0 %v424
    %732 = vmatprep.subr.mxu0 %v429
    %733 = vmatpush1.msra.mxu0 %v428
    %734 = vmatprep.subr.mxu0 %v433
    %735 = vmatpush1.msra.mxu0 %v432
    %736 = vmatprep.subr.mxu0 %v437
    %737 = vmatpush1.msra.mxu0 %v436
    %738 = vmatprep.subr.mxu0 %v441
    %739 = vmatpush1.msra.mxu0 %v440
    %740 = vmatprep.subr.mxu0 %v445
    %741 = vmatpush1.msra.mxu0 %v444
    %742 = vmatprep.subr.mxu0 %v449
    %743 = vmatpush1.msra.mxu0 %v448
    %744 = vmatprep.subr.mxu0 %v453
    %745 = vmatpush1.msra.mxu0 %v452
    %746 = vmatprep.subr.mxu0 %v457
    %747 = vmatpush1.msra.mxu0 %v456
    %748 = vmatprep.subr.mxu0 %v461
    %749 = vmatpush1.msra.mxu0 %v460
    %750 = vmatprep.subr.mxu0 %v465
    %751 = vmatpush1.msra.mxu0 %v464
    %752 = vmatprep.subr.mxu0 %v469
    %753 = vmatpush1.msra.mxu0 %v468
    %754 = vmatprep.subr.mxu0 %v473
    %755 = vmatpush1.msra.mxu0 %v472
    %756 = vmatprep.subr.mxu0 %v477
    %757 = vmatpush1.msra.mxu0 %v476
    %758 = vmatprep.subr.mxu0 %v481
    %759 = vmatpush1.msra.mxu0 %v480
    %760 = vmatprep.subr.mxu0 0.0
    %761 = vmatpush1.msra.mxu0 0.0
    %762 = vmatprep.subr.mxu0 0.0
    %763 = vmatpush1.msra.mxu0 0.0
    %764 = vmatprep.subr.mxu0 0.0
    %765 = vmatpush1.msra.mxu0 0.0
    %766 = vmatprep.subr.mxu0 0.0
    %767 = vmatpush1.msra.mxu0 0.0
    %768 = vmatprep.subr.mxu0 0.0
    %769 = vmatpush1.msra.mxu0 0.0
    %770 = vmatprep.subr.mxu0 0.0
    %771 = vmatpush1.msra.mxu0 0.0
    %772 = vmatprep.subr.mxu0 0.0
    %773 = vmatpush1.msra.mxu0 0.0
    %774 = vmatprep.subr.mxu0 0.0
    %775 = vmatpush1.msra.mxu0 0.0
    %776 = vmatprep.subr.mxu0 0.0
    %777 = vmatpush1.msra.mxu0 0.0
    %778 = vmatprep.subr.mxu0 0.0
    %779 = vmatpush1.msra.mxu0 0.0
    %780 = vmatprep.subr.mxu0 0.0
    %781 = vmatpush1.msra.mxu0 0.0
    %782 = vmatprep.subr.mxu0 0.0
    %783 = vmatpush1.msra.mxu0 0.0
    %784 = vmatprep.subr.mxu0 0.0
    %785 = vmatpush1.msra.mxu0 0.0
    %786 = vmatprep.subr.mxu0 0.0
    %787 = vmatpush1.msra.mxu0 0.0
    %788 = vmatprep.subr.mxu0 0.0
    %789 = vmatpush1.msra.mxu0 0.0
    %790 = vmatprep.subr.mxu0 0.0
    %791 = vmatpush1.msra.mxu0 0.0
    %792 = vmatprep.mubr.f32.mxu0 0.0
    %793 = vmatmul.mubr.f32.gmra.mrb[0].mxu0 %v651
    %v794 = vpop.f32.mrb[0].mxu0
    %v795 = vadd.f32 0.0, %v794
    %v796 = vpop.f32.mrb[0].mxu0
    %v797 = vadd.f32 0.0, %v796
    %798 = vdwg.mxu0
    %v799 = vadd.f32 %v653, %v724
    %v800 = vadd.f32 %v654, %v726
    %v801 = vadd.f32 %v655, %v795
    %v802 = vadd.f32 %v656, %v797
    %v803 = vxor.u32 %v799, 2147483648
    %v804 = vxor.u32 %v800, 2147483648
    %v805 = vxor.u32 %v801, 2147483648
    %v806 = vmul.f32 %v803, 1.442695
    %v807 = vpow.pop %v806
    %v808 = vmul.f32 %v804, 1.442695
    %v809 = vpow.pop %v808
    %v810 = vmul.f32 %v805, 1.442695
    %v811 = vpow.pop %v810
    %v812 = vadd.f32 %v807, 1.0
    %v813 = vadd.f32 %v809, 1.0
    %v814 = vadd.f32 %v811, 1.0
    %v815 = vrcp.pop %v812
    %v816 = vmul.f32 1.0, %v815
    %v817 = vrcp.pop %v813
    %v818 = vmul.f32 1.0, %v817
    %v819 = vrcp.pop %v814
    %v820 = vmul.f32 1.0, %v819
    %v821 = vtanh.pop %v802
    %v822 = vmul.f32 %v818, %v649
    %v823 = vmul.f32 %v816, %v821
    %v824 = vadd.f32 %v822, %v823
    %v825 = vtanh.pop %v824
    %v826 = vmul.f32 %v820, %v825
    %s827 = scalar_lea.vmem [#allocation2], 64
    %v828 = vld [vmem:[%s827] sm:$0xff]
    %v829 = vld [vmem:[%s827 + $0x8] sm:$0xff]
    %v830 = vld [vmem:[%s827 + $0x10] sm:$0xff]
    %v831 = vld [vmem:[%s827 + $0x18] sm:$0xff]
    %832 = vmatprep.subr.mxu0 %v419
    %833 = vmatpush1.msra.mxu0 %v418
    %834 = vmatprep.subr.mxu0 %v423
    %835 = vmatpush1.msra.mxu0 %v422
    %836 = vmatprep.subr.mxu0 %v427
    %837 = vmatpush1.msra.mxu0 %v426
    %838 = vmatprep.subr.mxu0 %v431
    %839 = vmatpush1.msra.mxu0 %v430
    %840 = vmatprep.subr.mxu0 %v435
    %841 = vmatpush1.msra.mxu0 %v434
    %842 = vmatprep.subr.mxu0 %v439
    %843 = vmatpush1.msra.mxu0 %v438
    %844 = vmatprep.subr.mxu0 %v443
    %845 = vmatpush1.msra.mxu0 %v442
    %846 = vmatprep.subr.mxu0 %v447
    %847 = vmatpush1.msra.mxu0 %v446
    %848 = vmatprep.subr.mxu0 %v451
    %849 = vmatpush1.msra.mxu0 %v450
    %850 = vmatprep.subr.mxu0 %v455
    %851 = vmatpush1.msra.mxu0 %v454
    %852 = vmatprep.subr.mxu0 %v459
    %853 = vmatpush1.msra.mxu0 %v458
    %854 = vmatprep.subr.mxu0 %v463
    %855 = vmatpush1.msra.mxu0 %v462
    %856 = vmatprep.subr.mxu0 %v467
    %857 = vmatpush1.msra.mxu0 %v466
    %858 = vmatprep.subr.mxu0 %v471
    %859 = vmatpush1.msra.mxu0 %v470
    %860 = vmatprep.subr.mxu0 %v475
    %861 = vmatpush1.msra.mxu0 %v474
    %862 = vmatprep.subr.mxu0 %v479
    %863 = vmatpush1.msra.mxu0 %v478
    %864 = vmatprep.subr.mxu0 0.0
    %865 = vmatpush1.msra.mxu0 0.0
    %866 = vmatprep.subr.mxu0 0.0
    %867 = vmatpush1.msra.mxu0 0.0
    %868 = vmatprep.subr.mxu0 0.0
    %869 = vmatpush1.msra.mxu0 0.0
    %870 = vmatprep.subr.mxu0 0.0
    %871 = vmatpush1.msra.mxu0 0.0
    %872 = vmatprep.subr.mxu0 0.0
    %873 = vmatpush1.msra.mxu0 0.0
    %874 = vmatprep.subr.mxu0 0.0
    %875 = vmatpush1.msra.mxu0 0.0
    %876 = vmatprep.subr.mxu0 0.0
    %877 = vmatpush1.msra.mxu0 0.0
    %878 = vmatprep.subr.mxu0 0.0
    %879 = vmatpush1.msra.mxu0 0.0
    %880 = vmatprep.subr.mxu0 0.0
    %881 = vmatpush1.msra.mxu0 0.0
    %882 = vmatprep.subr.mxu0 0.0
    %883 = vmatpush1.msra.mxu0 0.0
    %884 = vmatprep.subr.mxu0 0.0
    %885 = vmatpush1.msra.mxu0 0.0
    %886 = vmatprep.subr.mxu0 0.0
    %887 = vmatpush1.msra.mxu0 0.0
    %888 = vmatprep.subr.mxu0 0.0
    %889 = vmatpush1.msra.mxu0 0.0
    %890 = vmatprep.subr.mxu0 0.0
    %891 = vmatpush1.msra.mxu0 0.0
    %892 = vmatprep.subr.mxu0 0.0
    %893 = vmatpush1.msra.mxu0 0.0
    %894 = vmatprep.subr.mxu0 0.0
    %895 = vmatpush1.msra.mxu0 0.0
    %896 = vmatprep.mubr.f32.mxu0 0.0
    %897 = vmatmul.mubr.f32.gmra.mrb[0].mxu0 %v826
    %v898 = vpop.f32.mrb[0].mxu0
    %v899 = vadd.f32 0.0, %v898
    %v900 = vpop.f32.mrb[0].mxu0
    %v901 = vadd.f32 0.0, %v900
    %902 = vdwg.mxu0
    %903 = vmatprep.subr.mxu0 %v421
    %904 = vmatpush1.msra.mxu0 %v420
    %905 = vmatprep.subr.mxu0 %v425
    %906 = vmatpush1.msra.mxu0 %v424
    %907 = vmatprep.subr.mxu0 %v429
    %908 = vmatpush1.msra.mxu0 %v428
    %909 = vmatprep.subr.mxu0 %v433
    %910 = vmatpush1.msra.mxu0 %v432
    %911 = vmatprep.subr.mxu0 %v437
    %912 = vmatpush1.msra.mxu0 %v436
    %913 = vmatprep.subr.mxu0 %v441
    %914 = vmatpush1.msra.mxu0 %v440
    %915 = vmatprep.subr.mxu0 %v445
    %916 = vmatpush1.msra.mxu0 %v444
    %917 = vmatprep.subr.mxu0 %v449
    %918 = vmatpush1.msra.mxu0 %v448
    %919 = vmatprep.subr.mxu0 %v453
    %920 = vmatpush1.msra.mxu0 %v452
    %921 = vmatprep.subr.mxu0 %v457
    %922 = vmatpush1.msra.mxu0 %v456
    %923 = vmatprep.subr.mxu0 %v461
    %924 = vmatpush1.msra.mxu0 %v460
    %925 = vmatprep.subr.mxu0 %v465
    %926 = vmatpush1.msra.mxu0 %v464
    %927 = vmatprep.subr.mxu0 %v469
    %928 = vmatpush1.msra.mxu0 %v468
    %929 = vmatprep.subr.mxu0 %v473
    %930 = vmatpush1.msra.mxu0 %v472
    %931 = vmatprep.subr.mxu0 %v477
    %932 = vmatpush1.msra.mxu0 %v476
    %933 = vmatprep.subr.mxu0 %v481
    %934 = vmatpush1.msra.mxu0 %v480
    %935 = vmatprep.subr.mxu0 0.0
    %936 = vmatpush1.msra.mxu0 0.0
    %937 = vmatprep.subr.mxu0 0.0
    %938 = vmatpush1.msra.mxu0 0.0
    %939 = vmatprep.subr.mxu0 0.0
    %940 = vmatpush1.msra.mxu0 0.0
    %941 = vmatprep.subr.mxu0 0.0
    %942 = vmatpush1.msra.mxu0 0.0
    %943 = vmatprep.subr.mxu0 0.0
    %944 = vmatpush1.msra.mxu0 0.0
    %945 = vmatprep.subr.mxu0 0.0
    %946 = vmatpush1.msra.mxu0 0.0
    %947 = vmatprep.subr.mxu0 0.0
    %948 = vmatpush1.msra.mxu0 0.0
    %949 = vmatprep.subr.mxu0 0.0
    %950 = vmatpush1.msra.mxu0 0.0
    %951 = vmatprep.subr.mxu0 0.0
    %952 = vmatpush1.msra.mxu0 0.0
    %953 = vmatprep.subr.mxu0 0.0
    %954 = vmatpush1.msra.mxu0 0.0
    %955 = vmatprep.subr.mxu0 0.0
    %956 = vmatpush1.msra.mxu0 0.0
    %957 = vmatprep.subr.mxu0 0.0
    %958 = vmatpush1.msra.mxu0 0.0
    %959 = vmatprep.subr.mxu0 0.0
    %960 = vmatpush1.msra.mxu0 0.0
    %961 = vmatprep.subr.mxu0 0.0
    %962 = vmatpush1.msra.mxu0 0.0
    %963 = vmatprep.subr.mxu0 0.0
    %964 = vmatpush1.msra.mxu0 0.0
    %965 = vmatprep.subr.mxu0 0.0
    %966 = vmatpush1.msra.mxu0 0.0
    %967 = vmatprep.mubr.f32.mxu0 0.0
    %968 = vmatmul.mubr.f32.gmra.mrb[0].mxu0 %v826
    %v969 = vpop.f32.mrb[0].mxu0
    %v970 = vadd.f32 0.0, %v969
    %v971 = vpop.f32.mrb[0].mxu0
    %v972 = vadd.f32 0.0, %v971
    %973 = vdwg.mxu0
    %v974 = vadd.f32 %v828, %v899
    %v975 = vadd.f32 %v829, %v901
    %v976 = vadd.f32 %v830, %v970
    %v977 = vadd.f32 %v831, %v972
    %v978 = vxor.u32 %v974, 2147483648
    %v979 = vxor.u32 %v975, 2147483648
    %v980 = vxor.u32 %v976, 2147483648
    %v981 = vmul.f32 %v978, 1.442695
    %v982 = vpow.pop %v981
    %v983 = vmul.f32 %v979, 1.442695
    %v984 = vpow.pop %v983
    %v985 = vmul.f32 %v980, 1.442695
    %v986 = vpow.pop %v985
    %v987 = vadd.f32 %v982, 1.0
    %v988 = vadd.f32 %v984, 1.0
    %v989 = vadd.f32 %v986, 1.0
    %v990 = vrcp.pop %v987
    %v991 = vmul.f32 1.0, %v990
    %v992 = vrcp.pop %v988
    %v993 = vmul.f32 1.0, %v992
    %v994 = vrcp.pop %v989
    %v995 = vmul.f32 1.0, %v994
    %v996 = vtanh.pop %v977
    %v997 = vmul.f32 %v993, %v824
    %v998 = vmul.f32 %v991, %v996
    %v999 = vadd.f32 %v997, %v998
    %v1000 = vtanh.pop %v999
    %v1001 = vmul.f32 %v995, %v1000
    %s1002 = scalar_lea.vmem [#allocation2], 96
    %v1003 = vld [vmem:[%s1002] sm:$0xff]
    %v1004 = vld [vmem:[%s1002 + $0x8] sm:$0xff]
    %v1005 = vld [vmem:[%s1002 + $0x10] sm:$0xff]
    %v1006 = vld [vmem:[%s1002 + $0x18] sm:$0xff]
    %1007 = vmatprep.subr.mxu0 %v419
    %1008 = vmatpush1.msra.mxu0 %v418
    %1009 = vmatprep.subr.mxu0 %v423
    %1010 = vmatpush1.msra.mxu0 %v422
    %1011 = vmatprep.subr.mxu0 %v427
    %1012 = vmatpush1.msra.mxu0 %v426
    %1013 = vmatprep.subr.mxu0 %v431
    %1014 = vmatpush1.msra.mxu0 %v430
    %1015 = vmatprep.subr.mxu0 %v435
    %1016 = vmatpush1.msra.mxu0 %v434
    %1017 = vmatprep.subr.mxu0 %v439
    %1018 = vmatpush1.msra.mxu0 %v438
    %1019 = vmatprep.subr.mxu0 %v443
    %1020 = vmatpush1.msra.mxu0 %v442
    %1021 = vmatprep.subr.mxu0 %v447
    %1022 = vmatpush1.msra.mxu0 %v446
    %1023 = vmatprep.subr.mxu0 %v451
    %1024 = vmatpush1.msra.mxu0 %v450
    %1025 = vmatprep.subr.mxu0 %v455
    %1026 = vmatpush1.msra.mxu0 %v454
    %1027 = vmatprep.subr.mxu0 %v459
    %1028 = vmatpush1.msra.mxu0 %v458
    %1029 = vmatprep.subr.mxu0 %v463
    %1030 = vmatpush1.msra.mxu0 %v462
    %1031 = vmatprep.subr.mxu0 %v467
    %1032 = vmatpush1.msra.mxu0 %v466
    %1033 = vmatprep.subr.mxu0 %v471
    %1034 = vmatpush1.msra.mxu0 %v470
    %1035 = vmatprep.subr.mxu0 %v475
    %1036 = vmatpush1.msra.mxu0 %v474
    %1037 = vmatprep.subr.mxu0 %v479
    %1038 = vmatpush1.msra.mxu0 %v478
    %1039 = vmatprep.subr.mxu0 0.0
    %1040 = vmatpush1.msra.mxu0 0.0
    %1041 = vmatprep.subr.mxu0 0.0
    %1042 = vmatpush1.msra.mxu0 0.0
    %1043 = vmatprep.subr.mxu0 0.0
    %1044 = vmatpush1.msra.mxu0 0.0
    %1045 = vmatprep.subr.mxu0 0.0
    %1046 = vmatpush1.msra.mxu0 0.0
    %1047 = vmatprep.subr.mxu0 0.0
    %1048 = vmatpush1.msra.mxu0 0.0
    %1049 = vmatprep.subr.mxu0 0.0
    %1050 = vmatpush1.msra.mxu0 0.0
    %1051 = vmatprep.subr.mxu0 0.0
    %1052 = vmatpush1.msra.mxu0 0.0
    %1053 = vmatprep.subr.mxu0 0.0
    %1054 = vmatpush1.msra.mxu0 0.0
    %1055 = vmatprep.subr.mxu0 0.0
    %1056 = vmatpush1.msra.mxu0 0.0
    %1057 = vmatprep.subr.mxu0 0.0
    %1058 = vmatpush1.msra.mxu0 0.0
    %1059 = vmatprep.subr.mxu0 0.0
    %1060 = vmatpush1.msra.mxu0 0.0
    %1061 = vmatprep.subr.mxu0 0.0
    %1062 = vmatpush1.msra.mxu0 0.0
    %1063 = vmatprep.subr.mxu0 0.0
    %1064 = vmatpush1.msra.mxu0 0.0
    %1065 = vmatprep.subr.mxu0 0.0
    %1066 = vmatpush1.msra.mxu0 0.0
    %1067 = vmatprep.subr.mxu0 0.0
    %1068 = vmatpush1.msra.mxu0 0.0
    %1069 = vmatprep.subr.mxu0 0.0
    %1070 = vmatpush1.msra.mxu0 0.0
    %1071 = vmatprep.mubr.f32.mxu0 0.0
    %1072 = vmatmul.mubr.f32.gmra.mrb[0].mxu0 %v1001
    %v1073 = vpop.f32.mrb[0].mxu0
    %v1074 = vadd.f32 0.0, %v1073
    %v1075 = vpop.f32.mrb[0].mxu0
    %v1076 = vadd.f32 0.0, %v1075
    %1077 = vdwg.mxu0
    %1078 = vmatprep.subr.mxu0 %v421
    %1079 = vmatpush1.msra.mxu0 %v420
    %1080 = vmatprep.subr.mxu0 %v425
    %1081 = vmatpush1.msra.mxu0 %v424
    %1082 = vmatprep.subr.mxu0 %v429
    %1083 = vmatpush1.msra.mxu0 %v428
    %1084 = vmatprep.subr.mxu0 %v433
    %1085 = vmatpush1.msra.mxu0 %v432
    %1086 = vmatprep.subr.mxu0 %v437
    %1087 = vmatpush1.msra.mxu0 %v436
    %1088 = vmatprep.subr.mxu0 %v441
    %1089 = vmatpush1.msra.mxu0 %v440
    %1090 = vmatprep.subr.mxu0 %v445
    %1091 = vmatpush1.msra.mxu0 %v444
    %1092 = vmatprep.subr.mxu0 %v449
    %1093 = vmatpush1.msra.mxu0 %v448
    %1094 = vmatprep.subr.mxu0 %v453
    %1095 = vmatpush1.msra.mxu0 %v452
    %1096 = vmatprep.subr.mxu0 %v457
    %1097 = vmatpush1.msra.mxu0 %v456
    %1098 = vmatprep.subr.mxu0 %v461
    %1099 = vmatpush1.msra.mxu0 %v460
    %1100 = vmatprep.subr.mxu0 %v465
    %1101 = vmatpush1.msra.mxu0 %v464
    %1102 = vmatprep.subr.mxu0 %v469
    %1103 = vmatpush1.msra.mxu0 %v468
    %1104 = vmatprep.subr.mxu0 %v473
    %1105 = vmatpush1.msra.mxu0 %v472
    %1106 = vmatprep.subr.mxu0 %v477
    %1107 = vmatpush1.msra.mxu0 %v476
    %1108 = vmatprep.subr.mxu0 %v481
    %1109 = vmatpush1.msra.mxu0 %v480
    %1110 = vmatprep.subr.mxu0 0.0
    %1111 = vmatpush1.msra.mxu0 0.0
    %1112 = vmatprep.subr.mxu0 0.0
    %1113 = vmatpush1.msra.mxu0 0.0
    %1114 = vmatprep.subr.mxu0 0.0
    %1115 = vmatpush1.msra.mxu0 0.0
    %1116 = vmatprep.subr.mxu0 0.0
    %1117 = vmatpush1.msra.mxu0 0.0
    %1118 = vmatprep.subr.mxu0 0.0
    %1119 = vmatpush1.msra.mxu0 0.0
    %1120 = vmatprep.subr.mxu0 0.0
    %1121 = vmatpush1.msra.mxu0 0.0
    %1122 = vmatprep.subr.mxu0 0.0
    %1123 = vmatpush1.msra.mxu0 0.0
    %1124 = vmatprep.subr.mxu0 0.0
    %1125 = vmatpush1.msra.mxu0 0.0
    %1126 = vmatprep.subr.mxu0 0.0
    %1127 = vmatpush1.msra.mxu0 0.0
    %1128 = vmatprep.subr.mxu0 0.0
    %1129 = vmatpush1.msra.mxu0 0.0
    %1130 = vmatprep.subr.mxu0 0.0
    %1131 = vmatpush1.msra.mxu0 0.0
    %1132 = vmatprep.subr.mxu0 0.0
    %1133 = vmatpush1.msra.mxu0 0.0
    %1134 = vmatprep.subr.mxu0 0.0
    %1135 = vmatpush1.msra.mxu0 0.0
    %1136 = vmatprep.subr.mxu0 0.0
    %1137 = vmatpush1.msra.mxu0 0.0
    %1138 = vmatprep.subr.mxu0 0.0
    %1139 = vmatpush1.msra.mxu0 0.0
    %1140 = vmatprep.subr.mxu0 0.0
    %1141 = vmatpush1.msra.mxu0 0.0
    %1142 = vmatprep.mubr.f32.mxu0 0.0
    %1143 = vmatmul.mubr.f32.gmra.mrb[0].mxu0 %v1001
    %v1144 = vpop.f32.mrb[0].mxu0
    %v1145 = vadd.f32 0.0, %v1144
    %v1146 = vpop.f32.mrb[0].mxu0
    %v1147 = vadd.f32 0.0, %v1146
    %1148 = vdwg.mxu0
    %v1149 = vadd.f32 %v1003, %v1074
    %v1150 = vadd.f32 %v1004, %v1076
    %v1151 = vadd.f32 %v1005, %v1145
    %v1152 = vadd.f32 %v1006, %v1147
    %v1153 = vxor.u32 %v1149, 2147483648
    %v1154 = vxor.u32 %v1150, 2147483648
    %v1155 = vxor.u32 %v1151, 2147483648
    %v1156 = vmul.f32 %v1153, 1.442695
    %v1157 = vpow.pop %v1156
    %v1158 = vmul.f32 %v1154, 1.442695
    %v1159 = vpow.pop %v1158
    %v1160 = vmul.f32 %v1155, 1.442695
    %v1161 = vpow.pop %v1160
    %v1162 = vadd.f32 %v1157, 1.0
    %v1163 = vadd.f32 %v1159, 1.0
    %v1164 = vadd.f32 %v1161, 1.0
    %v1165 = vrcp.pop %v1162
    %v1166 = vmul.f32 1.0, %v1165
    %v1167 = vrcp.pop %v1163
    %v1168 = vmul.f32 1.0, %v1167
    %v1169 = vrcp.pop %v1164
    %v1170 = vmul.f32 1.0, %v1169
    %v1171 = vtanh.pop %v1152
    %v1172 = vmul.f32 %v1168, %v999
    %v1173 = vmul.f32 %v1166, %v1171
    %v1174 = vadd.f32 %v1172, %v1173
    %v1175 = vtanh.pop %v1174
    %v1176 = vmul.f32 %v1170, %v1175
    %s1177 = scalar_lea.vmem [#allocation2], 128
    %v1178 = vld [vmem:[%s1177] sm:$0xff]
    %v1179 = vld [vmem:[%s1177 + $0x8] sm:$0xff]
    %v1180 = vld [vmem:[%s1177 + $0x10] sm:$0xff]
    %v1181 = vld [vmem:[%s1177 + $0x18] sm:$0xff]
    %1182 = vmatprep.subr.mxu0 %v419
    %1183 = vmatpush1.msra.mxu0 %v418
    %1184 = vmatprep.subr.mxu0 %v423
    %1185 = vmatpush1.msra.mxu0 %v422
    %1186 = vmatprep.subr.mxu0 %v427
    %1187 = vmatpush1.msra.mxu0 %v426
    %1188 = vmatprep.subr.mxu0 %v431
    %1189 = vmatpush1.msra.mxu0 %v430
    %1190 = vmatprep.subr.mxu0 %v435
    %1191 = vmatpush1.msra.mxu0 %v434
    %1192 = vmatprep.subr.mxu0 %v439
    %1193 = vmatpush1.msra.mxu0 %v438
    %1194 = vmatprep.subr.mxu0 %v443
    %1195 = vmatpush1.msra.mxu0 %v442
    %1196 = vmatprep.subr.mxu0 %v447
    %1197 = vmatpush1.msra.mxu0 %v446
    %1198 = vmatprep.subr.mxu0 %v451
    %1199 = vmatpush1.msra.mxu0 %v450
    %1200 = vmatprep.subr.mxu0 %v455
    %1201 = vmatpush1.msra.mxu0 %v454
    %1202 = vmatprep.subr.mxu0 %v459
    %1203 = vmatpush1.msra.mxu0 %v458
    %1204 = vmatprep.subr.mxu0 %v463
    %1205 = vmatpush1.msra.mxu0 %v462
    %1206 = vmatprep.subr.mxu0 %v467
    %1207 = vmatpush1.msra.mxu0 %v466
    %1208 = vmatprep.subr.mxu0 %v471
    %1209 = vmatpush1.msra.mxu0 %v470
    %1210 = vmatprep.subr.mxu0 %v475
    %1211 = vmatpush1.msra.mxu0 %v474
    %1212 = vmatprep.subr.mxu0 %v479
    %1213 = vmatpush1.msra.mxu0 %v478
    %1214 = vmatprep.subr.mxu0 0.0
    %1215 = vmatpush1.msra.mxu0 0.0
    %1216 = vmatprep.subr.mxu0 0.0
    %1217 = vmatpush1.msra.mxu0 0.0
    %1218 = vmatprep.subr.mxu0 0.0
    %1219 = vmatpush1.msra.mxu0 0.0
    %1220 = vmatprep.subr.mxu0 0.0
    %1221 = vmatpush1.msra.mxu0 0.0
    %1222 = vmatprep.subr.mxu0 0.0
    %1223 = vmatpush1.msra.mxu0 0.0
    %1224 = vmatprep.subr.mxu0 0.0
    %1225 = vmatpush1.msra.mxu0 0.0
    %1226 = vmatprep.subr.mxu0 0.0
    %1227 = vmatpush1.msra.mxu0 0.0
    %1228 = vmatprep.subr.mxu0 0.0
    %1229 = vmatpush1.msra.mxu0 0.0
    %1230 = vmatprep.subr.mxu0 0.0
    %1231 = vmatpush1.msra.mxu0 0.0
    %1232 = vmatprep.subr.mxu0 0.0
    %1233 = vmatpush1.msra.mxu0 0.0
    %1234 = vmatprep.subr.mxu0 0.0
    %1235 = vmatpush1.msra.mxu0 0.0
    %1236 = vmatprep.subr.mxu0 0.0
    %1237 = vmatpush1.msra.mxu0 0.0
    %1238 = vmatprep.subr.mxu0 0.0
    %1239 = vmatpush1.msra.mxu0 0.0
    %1240 = vmatprep.subr.mxu0 0.0
    %1241 = vmatpush1.msra.mxu0 0.0
    %1242 = vmatprep.subr.mxu0 0.0
    %1243 = vmatpush1.msra.mxu0 0.0
    %1244 = vmatprep.subr.mxu0 0.0
    %1245 = vmatpush1.msra.mxu0 0.0
    %1246 = vmatprep.mubr.f32.mxu0 0.0
    %1247 = vmatmul.mubr.f32.gmra.mrb[0].mxu0 %v1176
    %v1248 = vpop.f32.mrb[0].mxu0
    %v1249 = vadd.f32 0.0, %v1248
    %v1250 = vpop.f32.mrb[0].mxu0
    %v1251 = vadd.f32 0.0, %v1250
    %1252 = vdwg.mxu0
    %1253 = vmatprep.subr.mxu0 %v421
    %1254 = vmatpush1.msra.mxu0 %v420
    %1255 = vmatprep.subr.mxu0 %v425
    %1256 = vmatpush1.msra.mxu0 %v424
    %1257 = vmatprep.subr.mxu0 %v429
    %1258 = vmatpush1.msra.mxu0 %v428
    %1259 = vmatprep.subr.mxu0 %v433
    %1260 = vmatpush1.msra.mxu0 %v432
    %1261 = vmatprep.subr.mxu0 %v437
    %1262 = vmatpush1.msra.mxu0 %v436
    %1263 = vmatprep.subr.mxu0 %v441
    %1264 = vmatpush1.msra.mxu0 %v440
    %1265 = vmatprep.subr.mxu0 %v445
    %1266 = vmatpush1.msra.mxu0 %v444
    %1267 = vmatprep.subr.mxu0 %v449
    %1268 = vmatpush1.msra.mxu0 %v448
    %1269 = vmatprep.subr.mxu0 %v453
    %1270 = vmatpush1.msra.mxu0 %v452
    %1271 = vmatprep.subr.mxu0 %v457
    %1272 = vmatpush1.msra.mxu0 %v456
    %1273 = vmatprep.subr.mxu0 %v461
    %1274 = vmatpush1.msra.mxu0 %v460
    %1275 = vmatprep.subr.mxu0 %v465
    %1276 = vmatpush1.msra.mxu0 %v464
    %1277 = vmatprep.subr.mxu0 %v469
    %1278 = vmatpush1.msra.mxu0 %v468
    %1279 = vmatprep.subr.mxu0 %v473
    %1280 = vmatpush1.msra.mxu0 %v472
    %1281 = vmatprep.subr.mxu0 %v477
    %1282 = vmatpush1.msra.mxu0 %v476
    %1283 = vmatprep.subr.mxu0 %v481
    %1284 = vmatpush1.msra.mxu0 %v480
    %1285 = vmatprep.subr.mxu0 0.0
    %1286 = vmatpush1.msra.mxu0 0.0
    %1287 = vmatprep.subr.mxu0 0.0
    %1288 = vmatpush1.msra.mxu0 0.0
    %1289 = vmatprep.subr.mxu0 0.0
    %1290 = vmatpush1.msra.mxu0 0.0
    %1291 = vmatprep.subr.mxu0 0.0
    %1292 = vmatpush1.msra.mxu0 0.0
    %1293 = vmatprep.subr.mxu0 0.0
    %1294 = vmatpush1.msra.mxu0 0.0
    %1295 = vmatprep.subr.mxu0 0.0
    %1296 = vmatpush1.msra.mxu0 0.0
    %1297 = vmatprep.subr.mxu0 0.0
    %1298 = vmatpush1.msra.mxu0 0.0
    %1299 = vmatprep.subr.mxu0 0.0
    %1300 = vmatpush1.msra.mxu0 0.0
    %1301 = vmatprep.subr.mxu0 0.0
    %1302 = vmatpush1.msra.mxu0 0.0
    %1303 = vmatprep.subr.mxu0 0.0
    %1304 = vmatpush1.msra.mxu0 0.0
    %1305 = vmatprep.subr.mxu0 0.0
    %1306 = vmatpush1.msra.mxu0 0.0
    %1307 = vmatprep.subr.mxu0 0.0
    %1308 = vmatpush1.msra.mxu0 0.0
    %1309 = vmatprep.subr.mxu0 0.0
    %1310 = vmatpush1.msra.mxu0 0.0
    %1311 = vmatprep.subr.mxu0 0.0
    %1312 = vmatpush1.msra.mxu0 0.0
    %1313 = vmatprep.subr.mxu0 0.0
    %1314 = vmatpush1.msra.mxu0 0.0
    %1315 = vmatprep.subr.mxu0 0.0
    %1316 = vmatpush1.msra.mxu0 0.0
    %1317 = vmatprep.mubr.f32.mxu0 0.0
    %1318 = vmatmul.mubr.f32.gmra.mrb[0].mxu0 %v1176
    %v1319 = vpop.f32.mrb[0].mxu0
    %v1320 = vadd.f32 0.0, %v1319
    %v1321 = vpop.f32.mrb[0].mxu0
    %v1322 = vadd.f32 0.0, %v1321
    %1323 = vdwg.mxu0
    %v1324 = vadd.f32 %v1178, %v1249
    %v1325 = vadd.f32 %v1179, %v1251
    %v1326 = vadd.f32 %v1180, %v1320
    %v1327 = vadd.f32 %v1181, %v1322
    %v1328 = vxor.u32 %v1324, 2147483648
    %v1329 = vxor.u32 %v1325, 2147483648
    %v1330 = vxor.u32 %v1326, 2147483648
    %v1331 = vmul.f32 %v1328, 1.442695
    %v1332 = vpow.pop %v1331
    %v1333 = vmul.f32 %v1329, 1.442695
    %v1334 = vpow.pop %v1333
    %v1335 = vmul.f32 %v1330, 1.442695
    %v1336 = vpow.pop %v1335
    %v1337 = vadd.f32 %v1332, 1.0
    %v1338 = vadd.f32 %v1334, 1.0
    %v1339 = vadd.f32 %v1336, 1.0
    %v1340 = vrcp.pop %v1337
    %v1341 = vmul.f32 1.0, %v1340
    %v1342 = vrcp.pop %v1338
    %v1343 = vmul.f32 1.0, %v1342
    %v1344 = vrcp.pop %v1339
    %v1345 = vmul.f32 1.0, %v1344
    %v1346 = vtanh.pop %v1327
    %v1347 = vmul.f32 %v1343, %v1174
    %v1348 = vmul.f32 %v1341, %v1346
    %v1349 = vadd.f32 %v1347, %v1348
    %v1350 = vtanh.pop %v1349
    %v1351 = vmul.f32 %v1345, %v1350
    %s1352 = scalar_lea.vmem [#allocation2], 160
    %v1353 = vld [vmem:[%s1352] sm:$0xff]
    %v1354 = vld [vmem:[%s1352 + $0x8] sm:$0xff]
    %v1355 = vld [vmem:[%s1352 + $0x10] sm:$0xff]
    %v1356 = vld [vmem:[%s1352 + $0x18] sm:$0xff]
    %1357 = vmatprep.subr.mxu0 %v419
    %1358 = vmatpush1.msra.mxu0 %v418
    %1359 = vmatprep.subr.mxu0 %v423
    %1360 = vmatpush1.msra.mxu0 %v422
    %1361 = vmatprep.subr.mxu0 %v427
    %1362 = vmatpush1.msra.mxu0 %v426
    %1363 = vmatprep.subr.mxu0 %v431
    %1364 = vmatpush1.msra.mxu0 %v430
    %1365 = vmatprep.subr.mxu0 %v435
    %1366 = vmatpush1.msra.mxu0 %v434
    %1367 = vmatprep.subr.mxu0 %v439
    %1368 = vmatpush1.msra.mxu0 %v438
    %1369 = vmatprep.subr.mxu0 %v443
    %1370 = vmatpush1.msra.mxu0 %v442
    %1371 = vmatprep.subr.mxu0 %v447
    %1372 = vmatpush1.msra.mxu0 %v446
    %1373 = vmatprep.subr.mxu0 %v451
    %1374 = vmatpush1.msra.mxu0 %v450
    %1375 = vmatprep.subr.mxu0 %v455
    %1376 = vmatpush1.msra.mxu0 %v454
    %1377 = vmatprep.subr.mxu0 %v459
    %1378 = vmatpush1.msra.mxu0 %v458
    %1379 = vmatprep.subr.mxu0 %v463
    %1380 = vmatpush1.msra.mxu0 %v462
    %1381 = vmatprep.subr.mxu0 %v467
    %1382 = vmatpush1.msra.mxu0 %v466
    %1383 = vmatprep.subr.mxu0 %v471
    %1384 = vmatpush1.msra.mxu0 %v470
    %1385 = vmatprep.subr.mxu0 %v475
    %1386 = vmatpush1.msra.mxu0 %v474
    %1387 = vmatprep.subr.mxu0 %v479
    %1388 = vmatpush1.msra.mxu0 %v478
    %1389 = vmatprep.subr.mxu0 0.0
    %1390 = vmatpush1.msra.mxu0 0.0
    %1391 = vmatprep.subr.mxu0 0.0
    %1392 = vmatpush1.msra.mxu0 0.0
    %1393 = vmatprep.subr.mxu0 0.0
    %1394 = vmatpush1.msra.mxu0 0.0
    %1395 = vmatprep.subr.mxu0 0.0
    %1396 = vmatpush1.msra.mxu0 0.0
    %1397 = vmatprep.subr.mxu0 0.0
    %1398 = vmatpush1.msra.mxu0 0.0
    %1399 = vmatprep.subr.mxu0 0.0
    %1400 = vmatpush1.msra.mxu0 0.0
    %1401 = vmatprep.subr.mxu0 0.0
    %1402 = vmatpush1.msra.mxu0 0.0
    %1403 = vmatprep.subr.mxu0 0.0
    %1404 = vmatpush1.msra.mxu0 0.0
    %1405 = vmatprep.subr.mxu0 0.0
    %1406 = vmatpush1.msra.mxu0 0.0
    %1407 = vmatprep.subr.mxu0 0.0
    %1408 = vmatpush1.msra.mxu0 0.0
    %1409 = vmatprep.subr.mxu0 0.0
    %1410 = vmatpush1.msra.mxu0 0.0
    %1411 = vmatprep.subr.mxu0 0.0
    %1412 = vmatpush1.msra.mxu0 0.0
    %1413 = vmatprep.subr.mxu0 0.0
    %1414 = vmatpush1.msra.mxu0 0.0
    %1415 = vmatprep.subr.mxu0 0.0
    %1416 = vmatpush1.msra.mxu0 0.0
    %1417 = vmatprep.subr.mxu0 0.0
    %1418 = vmatpush1.msra.mxu0 0.0
    %1419 = vmatprep.subr.mxu0 0.0
    %1420 = vmatpush1.msra.mxu0 0.0
    %1421 = vmatprep.mubr.f32.mxu0 0.0
    %1422 = vmatmul.mubr.f32.gmra.mrb[0].mxu0 %v1351
    %v1423 = vpop.f32.mrb[0].mxu0
    %v1424 = vadd.f32 0.0, %v1423
    %v1425 = vpop.f32.mrb[0].mxu0
    %v1426 = vadd.f32 0.0, %v1425
    %1427 = vdwg.mxu0
    %1428 = vmatprep.subr.mxu0 %v421
    %1429 = vmatpush1.msra.mxu0 %v420
    %1430 = vmatprep.subr.mxu0 %v425
    %1431 = vmatpush1.msra.mxu0 %v424
    %1432 = vmatprep.subr.mxu0 %v429
    %1433 = vmatpush1.msra.mxu0 %v428
    %1434 = vmatprep.subr.mxu0 %v433
    %1435 = vmatpush1.msra.mxu0 %v432
    %1436 = vmatprep.subr.mxu0 %v437
    %1437 = vmatpush1.msra.mxu0 %v436
    %1438 = vmatprep.subr.mxu0 %v441
    %1439 = vmatpush1.msra.mxu0 %v440
    %1440 = vmatprep.subr.mxu0 %v445
    %1441 = vmatpush1.msra.mxu0 %v444
    %1442 = vmatprep.subr.mxu0 %v449
    %1443 = vmatpush1.msra.mxu0 %v448
    %1444 = vmatprep.subr.mxu0 %v453
    %1445 = vmatpush1.msra.mxu0 %v452
    %1446 = vmatprep.subr.mxu0 %v457
    %1447 = vmatpush1.msra.mxu0 %v456
    %1448 = vmatprep.subr.mxu0 %v461
    %1449 = vmatpush1.msra.mxu0 %v460
    %1450 = vmatprep.subr.mxu0 %v465
    %1451 = vmatpush1.msra.mxu0 %v464
    %1452 = vmatprep.subr.mxu0 %v469
    %1453 = vmatpush1.msra.mxu0 %v468
    %1454 = vmatprep.subr.mxu0 %v473
    %1455 = vmatpush1.msra.mxu0 %v472
    %1456 = vmatprep.subr.mxu0 %v477
    %1457 = vmatpush1.msra.mxu0 %v476
    %1458 = vmatprep.subr.mxu0 %v481
    %1459 = vmatpush1.msra.mxu0 %v480
    %1460 = vmatprep.subr.mxu0 0.0
    %1461 = vmatpush1.msra.mxu0 0.0
    %1462 = vmatprep.subr.mxu0 0.0
    %1463 = vmatpush1.msra.mxu0 0.0
    %1464 = vmatprep.subr.mxu0 0.0
    %1465 = vmatpush1.msra.mxu0 0.0
    %1466 = vmatprep.subr.mxu0 0.0
    %1467 = vmatpush1.msra.mxu0 0.0
    %1468 = vmatprep.subr.mxu0 0.0
    %1469 = vmatpush1.msra.mxu0 0.0
    %1470 = vmatprep.subr.mxu0 0.0
    %1471 = vmatpush1.msra.mxu0 0.0
    %1472 = vmatprep.subr.mxu0 0.0
    %1473 = vmatpush1.msra.mxu0 0.0
    %1474 = vmatprep.subr.mxu0 0.0
    %1475 = vmatpush1.msra.mxu0 0.0
    %1476 = vmatprep.subr.mxu0 0.0
    %1477 = vmatpush1.msra.mxu0 0.0
    %1478 = vmatprep.subr.mxu0 0.0
    %1479 = vmatpush1.msra.mxu0 0.0
    %1480 = vmatprep.subr.mxu0 0.0
    %1481 = vmatpush1.msra.mxu0 0.0
    %1482 = vmatprep.subr.mxu0 0.0
    %1483 = vmatpush1.msra.mxu0 0.0
    %1484 = vmatprep.subr.mxu0 0.0
    %1485 = vmatpush1.msra.mxu0 0.0
    %1486 = vmatprep.subr.mxu0 0.0
    %1487 = vmatpush1.msra.mxu0 0.0
    %1488 = vmatprep.subr.mxu0 0.0
    %1489 = vmatpush1.msra.mxu0 0.0
    %1490 = vmatprep.subr.mxu0 0.0
    %1491 = vmatpush1.msra.mxu0 0.0
    %1492 = vmatprep.mubr.f32.mxu0 0.0
    %1493 = vmatmul.mubr.f32.gmra.mrb[0].mxu0 %v1351
    %v1494 = vpop.f32.mrb[0].mxu0
    %v1495 = vadd.f32 0.0, %v1494
    %v1496 = vpop.f32.mrb[0].mxu0
    %v1497 = vadd.f32 0.0, %v1496
    %1498 = vdwg.mxu0
    %v1499 = vadd.f32 %v1353, %v1424
    %v1500 = vadd.f32 %v1354, %v1426
    %v1501 = vadd.f32 %v1355, %v1495
    %v1502 = vadd.f32 %v1356, %v1497
    %v1503 = vxor.u32 %v1499, 2147483648
    %v1504 = vxor.u32 %v1500, 2147483648
    %v1505 = vxor.u32 %v1501, 2147483648
    %v1506 = vmul.f32 %v1503, 1.442695
    %v1507 = vpow.pop %v1506
    %v1508 = vmul.f32 %v1504, 1.442695
    %v1509 = vpow.pop %v1508
    %v1510 = vmul.f32 %v1505, 1.442695
    %v1511 = vpow.pop %v1510
    %v1512 = vadd.f32 %v1507, 1.0
    %v1513 = vadd.f32 %v1509, 1.0
    %v1514 = vadd.f32 %v1511, 1.0
    %v1515 = vrcp.pop %v1512
    %v1516 = vmul.f32 1.0, %v1515
    %v1517 = vrcp.pop %v1513
    %v1518 = vmul.f32 1.0, %v1517
    %v1519 = vrcp.pop %v1514
    %v1520 = vmul.f32 1.0, %v1519
    %v1521 = vtanh.pop %v1502
    %v1522 = vmul.f32 %v1518, %v1349
    %v1523 = vmul.f32 %v1516, %v1521
    %v1524 = vadd.f32 %v1522, %v1523
    %v1525 = vtanh.pop %v1524
    %v1526 = vmul.f32 %v1520, %v1525
    %s1527 = scalar_lea.vmem [#allocation2], 192
    %v1528 = vld [vmem:[%s1527] sm:$0xff]
    %v1529 = vld [vmem:[%s1527 + $0x8] sm:$0xff]
    %v1530 = vld [vmem:[%s1527 + $0x10] sm:$0xff]
    %v1531 = vld [vmem:[%s1527 + $0x18] sm:$0xff]
    %1532 = vmatprep.subr.mxu0 %v419
    %1533 = vmatpush1.msra.mxu0 %v418
    %1534 = vmatprep.subr.mxu0 %v423
    %1535 = vmatpush1.msra.mxu0 %v422
    %1536 = vmatprep.subr.mxu0 %v427
    %1537 = vmatpush1.msra.mxu0 %v426
    %1538 = vmatprep.subr.mxu0 %v431
    %1539 = vmatpush1.msra.mxu0 %v430
    %1540 = vmatprep.subr.mxu0 %v435
    %1541 = vmatpush1.msra.mxu0 %v434
    %1542 = vmatprep.subr.mxu0 %v439
    %1543 = vmatpush1.msra.mxu0 %v438
    %1544 = vmatprep.subr.mxu0 %v443
    %1545 = vmatpush1.msra.mxu0 %v442
    %1546 = vmatprep.subr.mxu0 %v447
    %1547 = vmatpush1.msra.mxu0 %v446
    %1548 = vmatprep.subr.mxu0 %v451
    %1549 = vmatpush1.msra.mxu0 %v450
    %1550 = vmatprep.subr.mxu0 %v455
    %1551 = vmatpush1.msra.mxu0 %v454
    %1552 = vmatprep.subr.mxu0 %v459
    %1553 = vmatpush1.msra.mxu0 %v458
    %1554 = vmatprep.subr.mxu0 %v463
    %1555 = vmatpush1.msra.mxu0 %v462
    %1556 = vmatprep.subr.mxu0 %v467
    %1557 = vmatpush1.msra.mxu0 %v466
    %1558 = vmatprep.subr.mxu0 %v471
    %1559 = vmatpush1.msra.mxu0 %v470
    %1560 = vmatprep.subr.mxu0 %v475
    %1561 = vmatpush1.msra.mxu0 %v474
    %1562 = vmatprep.subr.mxu0 %v479
    %1563 = vmatpush1.msra.mxu0 %v478
    %1564 = vmatprep.subr.mxu0 0.0
    %1565 = vmatpush1.msra.mxu0 0.0
    %1566 = vmatprep.subr.mxu0 0.0
    %1567 = vmatpush1.msra.mxu0 0.0
    %1568 = vmatprep.subr.mxu0 0.0
    %1569 = vmatpush1.msra.mxu0 0.0
    %1570 = vmatprep.subr.mxu0 0.0
    %1571 = vmatpush1.msra.mxu0 0.0
    %1572 = vmatprep.subr.mxu0 0.0
    %1573 = vmatpush1.msra.mxu0 0.0
    %1574 = vmatprep.subr.mxu0 0.0
    %1575 = vmatpush1.msra.mxu0 0.0
    %1576 = vmatprep.subr.mxu0 0.0
    %1577 = vmatpush1.msra.mxu0 0.0
    %1578 = vmatprep.subr.mxu0 0.0
    %1579 = vmatpush1.msra.mxu0 0.0
    %1580 = vmatprep.subr.mxu0 0.0
    %1581 = vmatpush1.msra.mxu0 0.0
    %1582 = vmatprep.subr.mxu0 0.0
    %1583 = vmatpush1.msra.mxu0 0.0
    %1584 = vmatprep.subr.mxu0 0.0
    %1585 = vmatpush1.msra.mxu0 0.0
    %1586 = vmatprep.subr.mxu0 0.0
    %1587 = vmatpush1.msra.mxu0 0.0
    %1588 = vmatprep.subr.mxu0 0.0
    %1589 = vmatpush1.msra.mxu0 0.0
    %1590 = vmatprep.subr.mxu0 0.0
    %1591 = vmatpush1.msra.mxu0 0.0
    %1592 = vmatprep.subr.mxu0 0.0
    %1593 = vmatpush1.msra.mxu0 0.0
    %1594 = vmatprep.subr.mxu0 0.0
    %1595 = vmatpush1.msra.mxu0 0.0
    %1596 = vmatprep.mubr.f32.mxu0 0.0
    %1597 = vmatmul.mubr.f32.gmra.mrb[0].mxu0 %v1526
    %v1598 = vpop.f32.mrb[0].mxu0
    %v1599 = vadd.f32 0.0, %v1598
    %v1600 = vpop.f32.mrb[0].mxu0
    %v1601 = vadd.f32 0.0, %v1600
    %1602 = vdwg.mxu0
    %1603 = vmatprep.subr.mxu0 %v421
    %1604 = vmatpush1.msra.mxu0 %v420
    %1605 = vmatprep.subr.mxu0 %v425
    %1606 = vmatpush1.msra.mxu0 %v424
    %1607 = vmatprep.subr.mxu0 %v429
    %1608 = vmatpush1.msra.mxu0 %v428
    %1609 = vmatprep.subr.mxu0 %v433
    %1610 = vmatpush1.msra.mxu0 %v432
    %1611 = vmatprep.subr.mxu0 %v437
    %1612 = vmatpush1.msra.mxu0 %v436
    %1613 = vmatprep.subr.mxu0 %v441
    %1614 = vmatpush1.msra.mxu0 %v440
    %1615 = vmatprep.subr.mxu0 %v445
    %1616 = vmatpush1.msra.mxu0 %v444
    %1617 = vmatprep.subr.mxu0 %v449
    %1618 = vmatpush1.msra.mxu0 %v448
    %1619 = vmatprep.subr.mxu0 %v453
    %1620 = vmatpush1.msra.mxu0 %v452
    %1621 = vmatprep.subr.mxu0 %v457
    %1622 = vmatpush1.msra.mxu0 %v456
    %1623 = vmatprep.subr.mxu0 %v461
    %1624 = vmatpush1.msra.mxu0 %v460
    %1625 = vmatprep.subr.mxu0 %v465
    %1626 = vmatpush1.msra.mxu0 %v464
    %1627 = vmatprep.subr.mxu0 %v469
    %1628 = vmatpush1.msra.mxu0 %v468
    %1629 = vmatprep.subr.mxu0 %v473
    %1630 = vmatpush1.msra.mxu0 %v472
    %1631 = vmatprep.subr.mxu0 %v477
    %1632 = vmatpush1.msra.mxu0 %v476
    %1633 = vmatprep.subr.mxu0 %v481
    %1634 = vmatpush1.msra.mxu0 %v480
    %1635 = vmatprep.subr.mxu0 0.0
    %1636 = vmatpush1.msra.mxu0 0.0
    %1637 = vmatprep.subr.mxu0 0.0
    %1638 = vmatpush1.msra.mxu0 0.0
    %1639 = vmatprep.subr.mxu0 0.0
    %1640 = vmatpush1.msra.mxu0 0.0
    %1641 = vmatprep.subr.mxu0 0.0
    %1642 = vmatpush1.msra.mxu0 0.0
    %1643 = vmatprep.subr.mxu0 0.0
    %1644 = vmatpush1.msra.mxu0 0.0
    %1645 = vmatprep.subr.mxu0 0.0
    %1646 = vmatpush1.msra.mxu0 0.0
    %1647 = vmatprep.subr.mxu0 0.0
    %1648 = vmatpush1.msra.mxu0 0.0
    %1649 = vmatprep.subr.mxu0 0.0
    %1650 = vmatpush1.msra.mxu0 0.0
    %1651 = vmatprep.subr.mxu0 0.0
    %1652 = vmatpush1.msra.mxu0 0.0
    %1653 = vmatprep.subr.mxu0 0.0
    %1654 = vmatpush1.msra.mxu0 0.0
    %1655 = vmatprep.subr.mxu0 0.0
    %1656 = vmatpush1.msra.mxu0 0.0
    %1657 = vmatprep.subr.mxu0 0.0
    %1658 = vmatpush1.msra.mxu0 0.0
    %1659 = vmatprep.subr.mxu0 0.0
    %1660 = vmatpush1.msra.mxu0 0.0
    %1661 = vmatprep.subr.mxu0 0.0
    %1662 = vmatpush1.msra.mxu0 0.0
    %1663 = vmatprep.subr.mxu0 0.0
    %1664 = vmatpush1.msra.mxu0 0.0
    %1665 = vmatprep.subr.mxu0 0.0
    %1666 = vmatpush1.msra.mxu0 0.0
    %1667 = vmatprep.mubr.f32.mxu0 0.0
    %1668 = vmatmul.mubr.f32.gmra.mrb[0].mxu0 %v1526
    %v1669 = vpop.f32.mrb[0].mxu0
    %v1670 = vadd.f32 0.0, %v1669
    %v1671 = vpop.f32.mrb[0].mxu0
    %v1672 = vadd.f32 0.0, %v1671
    %1673 = vdwg.mxu0
    %v1674 = vadd.f32 %v1528, %v1599
    %v1675 = vadd.f32 %v1529, %v1601
    %v1676 = vadd.f32 %v1530, %v1670
    %v1677 = vadd.f32 %v1531, %v1672
    %v1678 = vxor.u32 %v1674, 2147483648
    %v1679 = vxor.u32 %v1675, 2147483648
    %v1680 = vxor.u32 %v1676, 2147483648
    %v1681 = vmul.f32 %v1678, 1.442695
    %v1682 = vpow.pop %v1681
    %v1683 = vmul.f32 %v1679, 1.442695
    %v1684 = vpow.pop %v1683
    %v1685 = vmul.f32 %v1680, 1.442695
    %v1686 = vpow.pop %v1685
    %v1687 = vadd.f32 %v1682, 1.0
    %v1688 = vadd.f32 %v1684, 1.0
    %v1689 = vadd.f32 %v1686, 1.0
    %v1690 = vrcp.pop %v1687
    %v1691 = vmul.f32 1.0, %v1690
    %v1692 = vrcp.pop %v1688
    %v1693 = vmul.f32 1.0, %v1692
    %v1694 = vrcp.pop %v1689
    %v1695 = vmul.f32 1.0, %v1694
    %v1696 = vtanh.pop %v1677
    %v1697 = vmul.f32 %v1693, %v1524
    %v1698 = vmul.f32 %v1691, %v1696
    %v1699 = vadd.f32 %v1697, %v1698
    %v1700 = vtanh.pop %v1699
    %v1701 = vmul.f32 %v1695, %v1700
    %s1702 = scalar_lea.vmem [#allocation2], 224
    %v1703 = vld [vmem:[%s1702] sm:$0xff]
    %v1704 = vld [vmem:[%s1702 + $0x8] sm:$0xff]
    %v1705 = vld [vmem:[%s1702 + $0x10] sm:$0xff]
    %v1706 = vld [vmem:[%s1702 + $0x18] sm:$0xff]
    %1707 = vmatprep.subr.mxu0 %v419
    %1708 = vmatpush1.msra.mxu0 %v418
    %1709 = vmatprep.subr.mxu0 %v423
    %1710 = vmatpush1.msra.mxu0 %v422
    %1711 = vmatprep.subr.mxu0 %v427
    %1712 = vmatpush1.msra.mxu0 %v426
    %1713 = vmatprep.subr.mxu0 %v431
    %1714 = vmatpush1.msra.mxu0 %v430
    %1715 = vmatprep.subr.mxu0 %v435
    %1716 = vmatpush1.msra.mxu0 %v434
    %1717 = vmatprep.subr.mxu0 %v439
    %1718 = vmatpush1.msra.mxu0 %v438
    %1719 = vmatprep.subr.mxu0 %v443
    %1720 = vmatpush1.msra.mxu0 %v442
    %1721 = vmatprep.subr.mxu0 %v447
    %1722 = vmatpush1.msra.mxu0 %v446
    %1723 = vmatprep.subr.mxu0 %v451
    %1724 = vmatpush1.msra.mxu0 %v450
    %1725 = vmatprep.subr.mxu0 %v455
    %1726 = vmatpush1.msra.mxu0 %v454
    %1727 = vmatprep.subr.mxu0 %v459
    %1728 = vmatpush1.msra.mxu0 %v458
    %1729 = vmatprep.subr.mxu0 %v463
    %1730 = vmatpush1.msra.mxu0 %v462
    %1731 = vmatprep.subr.mxu0 %v467
    %1732 = vmatpush1.msra.mxu0 %v466
    %1733 = vmatprep.subr.mxu0 %v471
    %1734 = vmatpush1.msra.mxu0 %v470
    %1735 = vmatprep.subr.mxu0 %v475
    %1736 = vmatpush1.msra.mxu0 %v474
    %1737 = vmatprep.subr.mxu0 %v479
    %1738 = vmatpush1.msra.mxu0 %v478
    %1739 = vmatprep.subr.mxu0 0.0
    %1740 = vmatpush1.msra.mxu0 0.0
    %1741 = vmatprep.subr.mxu0 0.0
    %1742 = vmatpush1.msra.mxu0 0.0
    %1743 = vmatprep.subr.mxu0 0.0
    %1744 = vmatpush1.msra.mxu0 0.0
    %1745 = vmatprep.subr.mxu0 0.0
    %1746 = vmatpush1.msra.mxu0 0.0
    %1747 = vmatprep.subr.mxu0 0.0
    %1748 = vmatpush1.msra.mxu0 0.0
    %1749 = vmatprep.subr.mxu0 0.0
    %1750 = vmatpush1.msra.mxu0 0.0
    %1751 = vmatprep.subr.mxu0 0.0
    %1752 = vmatpush1.msra.mxu0 0.0
    %1753 = vmatprep.subr.mxu0 0.0
    %1754 = vmatpush1.msra.mxu0 0.0
    %1755 = vmatprep.subr.mxu0 0.0
    %1756 = vmatpush1.msra.mxu0 0.0
    %1757 = vmatprep.subr.mxu0 0.0
    %1758 = vmatpush1.msra.mxu0 0.0
    %1759 = vmatprep.subr.mxu0 0.0
    %1760 = vmatpush1.msra.mxu0 0.0
    %1761 = vmatprep.subr.mxu0 0.0
    %1762 = vmatpush1.msra.mxu0 0.0
    %1763 = vmatprep.subr.mxu0 0.0
    %1764 = vmatpush1.msra.mxu0 0.0
    %1765 = vmatprep.subr.mxu0 0.0
    %1766 = vmatpush1.msra.mxu0 0.0
    %1767 = vmatprep.subr.mxu0 0.0
    %1768 = vmatpush1.msra.mxu0 0.0
    %1769 = vmatprep.subr.mxu0 0.0
    %1770 = vmatpush1.msra.mxu0 0.0
    %1771 = vmatprep.mubr.f32.mxu0 0.0
    %1772 = vmatmul.mubr.f32.gmra.mrb[0].mxu0 %v1701
    %v1773 = vpop.f32.mrb[0].mxu0
    %v1774 = vadd.f32 0.0, %v1773
    %v1775 = vpop.f32.mrb[0].mxu0
    %v1776 = vadd.f32 0.0, %v1775
    %1777 = vdwg.mxu0
    %1778 = vmatprep.subr.mxu0 %v421
    %1779 = vmatpush1.msra.mxu0 %v420
    %1780 = vmatprep.subr.mxu0 %v425
    %1781 = vmatpush1.msra.mxu0 %v424
    %1782 = vmatprep.subr.mxu0 %v429
    %1783 = vmatpush1.msra.mxu0 %v428
    %1784 = vmatprep.subr.mxu0 %v433
    %1785 = vmatpush1.msra.mxu0 %v432
    %1786 = vmatprep.subr.mxu0 %v437
    %1787 = vmatpush1.msra.mxu0 %v436
    %1788 = vmatprep.subr.mxu0 %v441
    %1789 = vmatpush1.msra.mxu0 %v440
    %1790 = vmatprep.subr.mxu0 %v445
    %1791 = vmatpush1.msra.mxu0 %v444
    %1792 = vmatprep.subr.mxu0 %v449
    %1793 = vmatpush1.msra.mxu0 %v448
    %1794 = vmatprep.subr.mxu0 %v453
    %1795 = vmatpush1.msra.mxu0 %v452
    %1796 = vmatprep.subr.mxu0 %v457
    %1797 = vmatpush1.msra.mxu0 %v456
    %1798 = vmatprep.subr.mxu0 %v461
    %1799 = vmatpush1.msra.mxu0 %v460
    %1800 = vmatprep.subr.mxu0 %v465
    %1801 = vmatpush1.msra.mxu0 %v464
    %1802 = vmatprep.subr.mxu0 %v469
    %1803 = vmatpush1.msra.mxu0 %v468
    %1804 = vmatprep.subr.mxu0 %v473
    %1805 = vmatpush1.msra.mxu0 %v472
    %1806 = vmatprep.subr.mxu0 %v477
    %1807 = vmatpush1.msra.mxu0 %v476
    %1808 = vmatprep.subr.mxu0 %v481
    %1809 = vmatpush1.msra.mxu0 %v480
    %1810 = vmatprep.subr.mxu0 0.0
    %1811 = vmatpush1.msra.mxu0 0.0
    %1812 = vmatprep.subr.mxu0 0.0
    %1813 = vmatpush1.msra.mxu0 0.0
    %1814 = vmatprep.subr.mxu0 0.0
    %1815 = vmatpush1.msra.mxu0 0.0
    %1816 = vmatprep.subr.mxu0 0.0
    %1817 = vmatpush1.msra.mxu0 0.0
    %1818 = vmatprep.subr.mxu0 0.0
    %1819 = vmatpush1.msra.mxu0 0.0
    %1820 = vmatprep.subr.mxu0 0.0
    %1821 = vmatpush1.msra.mxu0 0.0
    %1822 = vmatprep.subr.mxu0 0.0
    %1823 = vmatpush1.msra.mxu0 0.0
    %1824 = vmatprep.subr.mxu0 0.0
    %1825 = vmatpush1.msra.mxu0 0.0
    %1826 = vmatprep.subr.mxu0 0.0
    %1827 = vmatpush1.msra.mxu0 0.0
    %1828 = vmatprep.subr.mxu0 0.0
    %1829 = vmatpush1.msra.mxu0 0.0
    %1830 = vmatprep.subr.mxu0 0.0
    %1831 = vmatpush1.msra.mxu0 0.0
    %1832 = vmatprep.subr.mxu0 0.0
    %1833 = vmatpush1.msra.mxu0 0.0
    %1834 = vmatprep.subr.mxu0 0.0
    %1835 = vmatpush1.msra.mxu0 0.0
    %1836 = vmatprep.subr.mxu0 0.0
    %1837 = vmatpush1.msra.mxu0 0.0
    %1838 = vmatprep.subr.mxu0 0.0
    %1839 = vmatpush1.msra.mxu0 0.0
    %1840 = vmatprep.subr.mxu0 0.0
    %1841 = vmatpush1.msra.mxu0 0.0
    %1842 = vmatprep.mubr.f32.mxu0 0.0
    %1843 = vmatmul.mubr.f32.gmra.mrb[0].mxu0 %v1701
    %v1844 = vpop.f32.mrb[0].mxu0
    %v1845 = vadd.f32 0.0, %v1844
    %v1846 = vpop.f32.mrb[0].mxu0
    %v1847 = vadd.f32 0.0, %v1846
    %1848 = vdwg.mxu0
    %v1849 = vadd.f32 %v1703, %v1774
    %v1850 = vadd.f32 %v1704, %v1776
    %v1851 = vadd.f32 %v1705, %v1845
    %v1852 = vadd.f32 %v1706, %v1847
    %v1853 = vxor.u32 %v1849, 2147483648
    %v1854 = vxor.u32 %v1850, 2147483648
    %v1855 = vxor.u32 %v1851, 2147483648
    %v1856 = vmul.f32 %v1853, 1.442695
    %v1857 = vpow.pop %v1856
    %v1858 = vmul.f32 %v1854, 1.442695
    %v1859 = vpow.pop %v1858
    %v1860 = vmul.f32 %v1855, 1.442695
    %v1861 = vpow.pop %v1860
    %v1862 = vadd.f32 %v1857, 1.0
    %v1863 = vadd.f32 %v1859, 1.0
    %v1864 = vadd.f32 %v1861, 1.0
    %v1865 = vrcp.pop %v1862
    %v1866 = vmul.f32 1.0, %v1865
    %v1867 = vrcp.pop %v1863
    %v1868 = vmul.f32 1.0, %v1867
    %v1869 = vrcp.pop %v1864
    %v1870 = vmul.f32 1.0, %v1869
    %v1871 = vtanh.pop %v1852
    %v1872 = vmul.f32 %v1868, %v1699
    %v1873 = vmul.f32 %v1866, %v1871
    %v1874 = vadd.f32 %v1872, %v1873
    %v1875 = vtanh.pop %v1874
    %v1876 = vmul.f32 %v1870, %v1875
    %1877 = vst [vmem:[#allocation3] sm:$0xff] %v1876
    %1878 = vst [vmem:[#allocation4] sm:$0xff] %v1874
    %1879 = vst [vmem:[#allocation11] sm:$0xff] %v1876
    // Predicated region
    $region34: #{tpu_custom_call.1} parent=1 // pred_check
      _
    $region35: #{tpu_custom_call.1} parent=1 // pred_check_branch
      %1881 = sbr.rel (0) target = $region37
    $region36: #{tpu_custom_call.1} parent=1 // pred_region
      %s1883 = ssub.s32 128, 128
      %1884 = vsyncadd [#allocation7], %s1883
      %s1886 = sshll.u32 [#allocation11], 4
      %s1887 = int_to_ptr.vmem [resolvable:$true] %s1886
      %1889 = dma.vmem_to_hbm [thread:$0]  %s1887, 128, %s4, [#allocation7]
    $region37: #{tpu_custom_call.1} parent=1 // pred_fallthru
      _
    // Predicated region
    $region38: #{tpu_custom_call.1} parent=1 // pred_check
      _
    $region39: #{tpu_custom_call.1} parent=1 // pred_check_branch
      %1891 = sbr.rel (0) target = $region41
    $region40: #{tpu_custom_call.1} parent=1 // pred_region
      %1892 = dma.done [#allocation7], 128
    $region41: #{tpu_custom_call.1} parent=1 // pred_fallthru
      _
    %1893 = vsyncpa [#allocation6], 1
    %1894 = vsyncpa [#allocation9], 1
    %1895 = vsyncpa [#allocation7], 1

</llo_original>
